<compile_context>
chip_gen: v6e
topology: v6e:2x2x1
jax: 0.10.0
libtpu: 0.0.40
codegen_flags: <defaults>
</compile_context>

<pallas_src>
import jax
import jax.numpy as jnp
from jax.experimental import pallas as pl
from jax.experimental.pallas import tpu as pltpu

EPS = 1e-3


def conv_bn_kernel(x_ref, w_ref, gb_ref, o_ref):
    # x_ref : [Cin, M]    f32  (native channel-major activations, M = N*H*W)
    # w_ref : [Cin, Cout] bf16 (1x1 conv weight, transposed once at init)
    # gb_ref: [2, Cout]   f32  (row 0 = gamma, row 1 = beta)
    # o_ref : [M, Cout]   f32  (lane-dense: Cout = 3*128)
    x = x_ref[...].astype(jnp.bfloat16)   # in-kernel cast, no standalone convert HLO
    w = w_ref[...]

    # 1x1 conv == x^T @ w on the MXU: contract Cin (lhs dim 0, rhs dim 0),
    # accumulate in f32.
    y = jax.lax.dot_general(
        x, w,
        dimension_numbers=(((0,), (0,)), ((), ())),
        preferred_element_type=jnp.float32,
    )  # [M, Cout] f32

    m = y.shape[0]
    inv_m = jnp.float32(1.0 / m)

    # Two-pass batch statistics per output channel (column): mean, then
    # centered sum of squares (robust to large per-channel means).
    mean = jnp.sum(y, axis=0, keepdims=True) * inv_m              # [1, Cout]
    centered = y - mean
    var = jnp.sum(centered * centered, axis=0, keepdims=True) * inv_m
    inv_std = jax.lax.rsqrt(var + EPS)                            # EUP path

    gamma = gb_ref[0:1, :]                                        # [1, Cout]
    beta = gb_ref[1:2, :]                                         # [1, Cout]
    scale = gamma * inv_std                                       # [1, Cout]

    # One FMA sweep over the lane-dense tile.
    o_ref[...] = centered * scale + beta


def prepare_params(conv_w, gamma, beta):
    """One-time parameter prep (parameter-init time, NOT per call):
    weight -> bf16 [Cin, Cout]; gamma/beta packed as [2, Cout] f32."""
    w_bf = jnp.asarray(conv_w, dtype=jnp.bfloat16).T              # [Cin, Cout]
    gb = jnp.stack([gamma, beta], axis=0).astype(jnp.float32)     # [2, Cout]
    return w_bf, gb


@jax.jit
def conv2d_batchnorm(x_nchw, w_bf, gb):
    """x_nchw: [N, Cin, H, W] f32; w_bf: [Cin, Cout] bf16; gb: [2, Cout] f32."""
    N, Cin, H, W = x_nchw.shape
    Cout = w_bf.shape[1]
    M = N * H * W

    # Keep native channel-major layout: for N == 1 this is a free reshape.
    if N == 1:
        x_cm = x_nchw.reshape(Cin, M)
    else:
        # General fallback (module under test has N=1, so this path is unused).
        x_cm = jnp.transpose(x_nchw, (1, 0, 2, 3)).reshape(Cin, M)

    cost = pl.CostEstimate(
        flops=2 * M * Cin * Cout,
        transcendentals=Cout,
        bytes_accessed=(x_cm.size * 4 + w_bf.size * 2 + gb.size * 4
                        + M * Cout * 4),
    )

    out_mc = pl.pallas_call(
        conv_bn_kernel,
        out_shape=jax.ShapeDtypeStruct((M, Cout), jnp.float32),
        in_specs=[
            pl.BlockSpec(memory_space=pltpu.MemorySpace.VMEM),
            pl.BlockSpec(memory_space=pltpu.MemorySpace.VMEM),
            pl.BlockSpec(memory_space=pltpu.MemorySpace.VMEM),
        ],
        out_specs=pl.BlockSpec(memory_space=pltpu.MemorySpace.VMEM),
        cost_estimate=cost,
    )(x_cm, w_bf, gb)  # [M, Cout]

    # Cheap (75 KB) transpose back to NCHW in the wrapper.
    out_cm = out_mc.T  # [Cout, M]
    if N == 1:
        return out_cm.reshape(1, Cout, H, W)
    return jnp.transpose(out_cm.reshape(Cout, N, H, W), (1, 0, 2, 3))
    # TODO(synk): BatchNorm2d training mode also updates running_mean/running_var
    # (momentum=0.1, unbiased var); those buffer updates are not emitted here
    # (forward output only).


if __name__ == "__main__":
    key = jax.random.PRNGKey(0)
    k_x, k_w = jax.random.split(key)

    # Shapes from the module: x589 = [1, 1344, 7, 7], Conv2d(1344 -> 384, 1x1)
    N, Cin, H, W = 1, 1344, 7, 7
    Cout = 384

    x = jax.random.normal(k_x, (N, Cin, H, W), dtype=jnp.float32)
    conv_w = jax.random.normal(k_w, (Cout, Cin), dtype=jnp.float32) * (1.0 / jnp.sqrt(Cin))
    gamma = jnp.ones((Cout,), dtype=jnp.float32)   # PyTorch BN init
    beta = jnp.zeros((Cout,), dtype=jnp.float32)

    w_bf, gb = prepare_params(conv_w, gamma, beta)   # one-time param prep

    out = conv2d_batchnorm(x, w_bf, gb)
    jax.block_until_ready(out)

    # Pure-JAX reference with the same bf16-matmul semantics as the kernel.
    x_bf = x.reshape(Cin, N * H * W).astype(jnp.bfloat16).astype(jnp.float32)
    w_ref = conv_w.astype(jnp.bfloat16).astype(jnp.float32)
    y_ref = w_ref @ x_bf                                   # [Cout, M]
    mu = y_ref.mean(axis=1, keepdims=True)
    var = ((y_ref - mu) ** 2).mean(axis=1, keepdims=True)
    ref = (y_ref - mu) / jnp.sqrt(var + EPS) * gamma[:, None] + beta[:, None]
    ref = ref.reshape(1, Cout, H, W)

    assert out.shape == (N, Cout, H, W)
    assert jnp.max(jnp.abs(out - ref)) < 5e-3

    print("KERNEL_OK")
</pallas_src>

<mosaic_0001>
module attributes {stable_mosaic.version = 11 : i64} {
  func.func @conv_bn_kernel(%arg0: memref<1344x49xf32, #tpu.memory_space<vmem>>, %arg1: memref<1344x384xbf16, #tpu.memory_space<vmem>>, %arg2: memref<2x384xf32, #tpu.memory_space<vmem>>, %arg3: memref<49x384xf32, #tpu.memory_space<vmem>>) attributes {dimension_semantics = [], scalar_prefetch = 0 : i64, scratch_operands = 0 : i64, tpu.core_type = #tpu.core_type<tc>} {
    %c0 = arith.constant 0 : index
    %c0_0 = arith.constant 0 : index
    %0 = vector.load %arg0[%c0, %c0_0] : memref<1344x49xf32, #tpu.memory_space<vmem>>, vector<1344x49xf32>
    %1 = arith.truncf %0 : vector<1344x49xf32> to vector<1344x49xbf16>
    %c0_1 = arith.constant 0 : index
    %c0_2 = arith.constant 0 : index
    %2 = vector.load %arg1[%c0_1, %c0_2] : memref<1344x384xbf16, #tpu.memory_space<vmem>>, vector<1344x384xbf16>
    %cst = arith.constant dense<0.000000e+00> : vector<49x384xf32>
    %3 = tpu.matmul %1, %2, %cst {dimension_numbers = #tpu.dot_dimension_numbers<[0], [0], [1], [1], [0, 1, 1, 1], [], []>} : vector<1344x49xbf16>, vector<1344x384xbf16>, vector<49x384xf32> -> vector<49x384xf32>
    %cst_3 = arith.constant dense<0.000000e+00> : vector<384xf32>
    %4 = vector.multi_reduction <add>, %3, %cst_3 [0] : vector<49x384xf32> to vector<384xf32>
    %5 = vector.shape_cast %4 : vector<384xf32> to vector<1x384xf32>
    %cst_4 = arith.constant 0.0204081628 : f32
    %6 = vector.broadcast %cst_4 : f32 to vector<1x384xf32>
    %7 = arith.mulf %5, %6 : vector<1x384xf32>
    %8 = vector.broadcast %7 : vector<1x384xf32> to vector<49x384xf32>
    %9 = arith.subf %3, %8 : vector<49x384xf32>
    %10 = arith.mulf %9, %9 : vector<49x384xf32>
    %cst_5 = arith.constant dense<0.000000e+00> : vector<384xf32>
    %11 = vector.multi_reduction <add>, %10, %cst_5 [0] : vector<49x384xf32> to vector<384xf32>
    %12 = vector.shape_cast %11 : vector<384xf32> to vector<1x384xf32>
    %cst_6 = arith.constant 0.0204081628 : f32
    %13 = vector.broadcast %cst_6 : f32 to vector<1x384xf32>
    %14 = arith.mulf %12, %13 : vector<1x384xf32>
    %cst_7 = arith.constant 1.000000e-03 : f32
    %15 = vector.broadcast %cst_7 : f32 to vector<1x384xf32>
    %16 = arith.addf %14, %15 : vector<1x384xf32>
    %17 = math.rsqrt %16 : vector<1x384xf32>
    %c0_8 = arith.constant 0 : index
    %c0_9 = arith.constant 0 : index
    %18 = vector.load %arg2[%c0_8, %c0_9] : memref<2x384xf32, #tpu.memory_space<vmem>>, vector<1x384xf32>
    %c1 = arith.constant 1 : index
    %c0_10 = arith.constant 0 : index
    %19 = vector.load %arg2[%c1, %c0_10] : memref<2x384xf32, #tpu.memory_space<vmem>>, vector<1x384xf32>
    %20 = arith.mulf %18, %17 : vector<1x384xf32>
    %21 = vector.broadcast %20 : vector<1x384xf32> to vector<49x384xf32>
    %22 = arith.mulf %9, %21 : vector<49x384xf32>
    %23 = vector.broadcast %19 : vector<1x384xf32> to vector<49x384xf32>
    %24 = arith.addf %22, %23 : vector<49x384xf32>
    %c0_11 = arith.constant 0 : index
    %c0_12 = arith.constant 0 : index
    %25 = vector.load %arg3[%c0_11, %c0_12] : memref<49x384xf32, #tpu.memory_space<vmem>>, vector<49x384xf32>
    tpu.vector_store %arg3[%c0_11, %c0_12], %24 {strides = array<i32>} : memref<49x384xf32, #tpu.memory_space<vmem>>, vector<49x384xf32>,
    return
  }
}

</mosaic_0001>

<llo_original>
// kernel: conv2d_batchnorm.1
$region0: #{conv2d_batchnorm.1}
  #allocation0 [shape = 'u32[]', space=smem, size = 0x4, offset = 0x4, fixed_abs, tag = 'smem constant byte address 0x4 - core index']
  #allocation1 [shape = 'u32[144,128]{1,0:T(1,128)}', space=vmem, size = 0x12000, scoped, tag = 'internal scratch']
  %s0 = inlined_call_operand.vmem [shape: f32[1344,49], index: 0, kind: input, shape index: {}]
  %s1 = inlined_call_operand.vmem [shape: bf16[1344,384], index: 1, kind: input, shape index: {}]
  %s2 = inlined_call_operand.vmem [shape: f32[2,384], index: 2, kind: input, shape index: {}]
  %s3 = inlined_call_operand.vmem [shape: f32[49,384], index: 3, kind: output, shape index: {}]
  %s4 = sld [smem:[#allocation0]]
  $region22: #{conv2d_batchnorm.1} parent=0
    _
  %s6 = ssub.s32 1, %s4
  %s7 = scalar_select 0, %s6, %s4
  // Predicated region
  $region2: #{conv2d_batchnorm.1} parent=0 // pred_check
    _
  $region3: #{conv2d_batchnorm.1} parent=0 // pred_check_branch
    %9 = sbr.rel (0) target = $region5
  $region4: #{conv2d_batchnorm.1} parent=0 // pred_region
    _
  $region5: #{conv2d_batchnorm.1} parent=0 // pred_fallthru
    _
  // Predicated region
  $region6: #{conv2d_batchnorm.1} parent=0 // pred_check
    _
  $region7: #{conv2d_batchnorm.1} parent=0 // pred_check_branch
    %11 = sbr.rel (0) target = $region9
  $region8: #{conv2d_batchnorm.1} parent=0 // pred_region
    _
  $region9: #{conv2d_batchnorm.1} parent=0 // pred_fallthru
    _
  // Predicated region
  $region10: #{conv2d_batchnorm.1} parent=0 // pred_check
    _
  $region11: #{conv2d_batchnorm.1} parent=0 // pred_check_branch
    %13 = sbr.rel (0) target = $region13
  $region12: #{conv2d_batchnorm.1} parent=0 // pred_region
    _
  $region13: #{conv2d_batchnorm.1} parent=0 // pred_fallthru
    _
  %v15 = vld [vmem:[%s0] sm:$0xff]
  %v16 = vld [vmem:[%s0 + $0x8] sm:$0xff]
  %v17 = vld [vmem:[%s0 + $0x10] sm:$0xff]
  %v18 = vld [vmem:[%s0 + $0x18] sm:$0xff]
  %v19 = vld [vmem:[%s0 + $0x20] sm:$0xff]
  %v20 = vld [vmem:[%s0 + $0x28] sm:$0xff]
  %v21 = vld [vmem:[%s0 + $0x30] sm:$0xff]
  %v22 = vld [vmem:[%s0 + $0x38] sm:$0xff]
  %v23 = vld [vmem:[%s0 + $0x40] sm:$0xff]
  %v24 = vld [vmem:[%s0 + $0x48] sm:$0xff]
  %v25 = vld [vmem:[%s0 + $0x50] sm:$0xff]
  %v26 = vld [vmem:[%s0 + $0x58] sm:$0xff]
  %v27 = vld [vmem:[%s0 + $0x60] sm:$0xff]
  %v28 = vld [vmem:[%s0 + $0x68] sm:$0xff]
  %v29 = vld [vmem:[%s0 + $0x70] sm:$0xff]
  %v30 = vld [vmem:[%s0 + $0x78] sm:$0xff]
  %v31 = vld [vmem:[%s0 + $0x80] sm:$0xff]
  %v32 = vld [vmem:[%s0 + $0x88] sm:$0xff]
  %v33 = vld [vmem:[%s0 + $0x90] sm:$0xff]
  %v34 = vld [vmem:[%s0 + $0x98] sm:$0xff]
  %v35 = vld [vmem:[%s0 + $0xa0] sm:$0xff]
  %v36 = vld [vmem:[%s0 + $0xa8] sm:$0xff]
  %v37 = vld [vmem:[%s0 + $0xb0] sm:$0xff]
  %v38 = vld [vmem:[%s0 + $0xb8] sm:$0xff]
  %v39 = vld [vmem:[%s0 + $0xc0] sm:$0xff]
  %v40 = vld [vmem:[%s0 + $0xc8] sm:$0xff]
  %v41 = vld [vmem:[%s0 + $0xd0] sm:$0xff]
  %v42 = vld [vmem:[%s0 + $0xd8] sm:$0xff]
  %v43 = vld [vmem:[%s0 + $0xe0] sm:$0xff]
  %v44 = vld [vmem:[%s0 + $0xe8] sm:$0xff]
  %v45 = vld [vmem:[%s0 + $0xf0] sm:$0xff]
  %v46 = vld [vmem:[%s0 + $0xf8] sm:$0xff]
  %v47 = vld [vmem:[%s0 + $0x100] sm:$0xff]
  %v48 = vld [vmem:[%s0 + $0x108] sm:$0xff]
  %v49 = vld [vmem:[%s0 + $0x110] sm:$0xff]
  %v50 = vld [vmem:[%s0 + $0x118] sm:$0xff]
  %v51 = vld [vmem:[%s0 + $0x120] sm:$0xff]
  %v52 = vld [vmem:[%s0 + $0x128] sm:$0xff]
  %v53 = vld [vmem:[%s0 + $0x130] sm:$0xff]
  %v54 = vld [vmem:[%s0 + $0x138] sm:$0xff]
  %v55 = vld [vmem:[%s0 + $0x140] sm:$0xff]
  %v56 = vld [vmem:[%s0 + $0x148] sm:$0xff]
  %v57 = vld [vmem:[%s0 + $0x150] sm:$0xff]
  %v58 = vld [vmem:[%s0 + $0x158] sm:$0xff]
  %v59 = vld [vmem:[%s0 + $0x160] sm:$0xff]
  %v60 = vld [vmem:[%s0 + $0x168] sm:$0xff]
  %v61 = vld [vmem:[%s0 + $0x170] sm:$0xff]
  %v62 = vld [vmem:[%s0 + $0x178] sm:$0xff]
  %v63 = vld [vmem:[%s0 + $0x180] sm:$0xff]
  %v64 = vld [vmem:[%s0 + $0x188] sm:$0xff]
  %v65 = vld [vmem:[%s0 + $0x190] sm:$0xff]
  %v66 = vld [vmem:[%s0 + $0x198] sm:$0xff]
  %v67 = vld [vmem:[%s0 + $0x1a0] sm:$0xff]
  %v68 = vld [vmem:[%s0 + $0x1a8] sm:$0xff]
  %v69 = vld [vmem:[%s0 + $0x1b0] sm:$0xff]
  %v70 = vld [vmem:[%s0 + $0x1b8] sm:$0xff]
  %v71 = vld [vmem:[%s0 + $0x1c0] sm:$0xff]
  %v72 = vld [vmem:[%s0 + $0x1c8] sm:$0xff]
  %v73 = vld [vmem:[%s0 + $0x1d0] sm:$0xff]
  %v74 = vld [vmem:[%s0 + $0x1d8] sm:$0xff]
  %v75 = vld [vmem:[%s0 + $0x1e0] sm:$0xff]
  %v76 = vld [vmem:[%s0 + $0x1e8] sm:$0xff]
  %v77 = vld [vmem:[%s0 + $0x1f0] sm:$0xff]
  %v78 = vld [vmem:[%s0 + $0x1f8] sm:$0xff]
  %v79 = vld [vmem:[%s0 + $0x200] sm:$0xff]
  %v80 = vld [vmem:[%s0 + $0x208] sm:$0xff]
  %v81 = vld [vmem:[%s0 + $0x210] sm:$0xff]
  %v82 = vld [vmem:[%s0 + $0x218] sm:$0xff]
  %v83 = vld [vmem:[%s0 + $0x220] sm:$0xff]
  %v84 = vld [vmem:[%s0 + $0x228] sm:$0xff]
  %v85 = vld [vmem:[%s0 + $0x230] sm:$0xff]
  %v86 = vld [vmem:[%s0 + $0x238] sm:$0xff]
  %v87 = vld [vmem:[%s0 + $0x240] sm:$0xff]
  %v88 = vld [vmem:[%s0 + $0x248] sm:$0xff]
  %v89 = vld [vmem:[%s0 + $0x250] sm:$0xff]
  %v90 = vld [vmem:[%s0 + $0x258] sm:$0xff]
  %v91 = vld [vmem:[%s0 + $0x260] sm:$0xff]
  %v92 = vld [vmem:[%s0 + $0x268] sm:$0xff]
  %v93 = vld [vmem:[%s0 + $0x270] sm:$0xff]
  %v94 = vld [vmem:[%s0 + $0x278] sm:$0xff]
  %v95 = vld [vmem:[%s0 + $0x280] sm:$0xff]
  %v96 = vld [vmem:[%s0 + $0x288] sm:$0xff]
  %v97 = vld [vmem:[%s0 + $0x290] sm:$0xff]
  %v98 = vld [vmem:[%s0 + $0x298] sm:$0xff]
  %v99 = vld [vmem:[%s0 + $0x2a0] sm:$0xff]
  %v100 = vld [vmem:[%s0 + $0x2a8] sm:$0xff]
  %v101 = vld [vmem:[%s0 + $0x2b0] sm:$0xff]
  %v102 = vld [vmem:[%s0 + $0x2b8] sm:$0xff]
  %v103 = vld [vmem:[%s0 + $0x2c0] sm:$0xff]
  %v104 = vld [vmem:[%s0 + $0x2c8] sm:$0xff]
  %v105 = vld [vmem:[%s0 + $0x2d0] sm:$0xff]
  %v106 = vld [vmem:[%s0 + $0x2d8] sm:$0xff]
  %v107 = vld [vmem:[%s0 + $0x2e0] sm:$0xff]
  %v108 = vld [vmem:[%s0 + $0x2e8] sm:$0xff]
  %v109 = vld [vmem:[%s0 + $0x2f0] sm:$0xff]
  %v110 = vld [vmem:[%s0 + $0x2f8] sm:$0xff]
  %v111 = vld [vmem:[%s0 + $0x300] sm:$0xff]
  %v112 = vld [vmem:[%s0 + $0x308] sm:$0xff]
  %v113 = vld [vmem:[%s0 + $0x310] sm:$0xff]
  %v114 = vld [vmem:[%s0 + $0x318] sm:$0xff]
  %v115 = vld [vmem:[%s0 + $0x320] sm:$0xff]
  %v116 = vld [vmem:[%s0 + $0x328] sm:$0xff]
  %v117 = vld [vmem:[%s0 + $0x330] sm:$0xff]
  %v118 = vld [vmem:[%s0 + $0x338] sm:$0xff]
  %v119 = vld [vmem:[%s0 + $0x340] sm:$0xff]
  %v120 = vld [vmem:[%s0 + $0x348] sm:$0xff]
  %v121 = vld [vmem:[%s0 + $0x350] sm:$0xff]
  %v122 = vld [vmem:[%s0 + $0x358] sm:$0xff]
  %v123 = vld [vmem:[%s0 + $0x360] sm:$0xff]
  %v124 = vld [vmem:[%s0 + $0x368] sm:$0xff]
  %v125 = vld [vmem:[%s0 + $0x370] sm:$0xff]
  %v126 = vld [vmem:[%s0 + $0x378] sm:$0xff]
  %v127 = vld [vmem:[%s0 + $0x380] sm:$0xff]
  %v128 = vld [vmem:[%s0 + $0x388] sm:$0xff]
  %v129 = vld [vmem:[%s0 + $0x390] sm:$0xff]
  %v130 = vld [vmem:[%s0 + $0x398] sm:$0xff]
  %v131 = vld [vmem:[%s0 + $0x3a0] sm:$0xff]
  %v132 = vld [vmem:[%s0 + $0x3a8] sm:$0xff]
  %v133 = vld [vmem:[%s0 + $0x3b0] sm:$0xff]
  %v134 = vld [vmem:[%s0 + $0x3b8] sm:$0xff]
  %v135 = vld [vmem:[%s0 + $0x3c0] sm:$0xff]
  %v136 = vld [vmem:[%s0 + $0x3c8] sm:$0xff]
  %v137 = vld [vmem:[%s0 + $0x3d0] sm:$0xff]
  %v138 = vld [vmem:[%s0 + $0x3d8] sm:$0xff]
  %v139 = vld [vmem:[%s0 + $0x3e0] sm:$0xff]
  %v140 = vld [vmem:[%s0 + $0x3e8] sm:$0xff]
  %v141 = vld [vmem:[%s0 + $0x3f0] sm:$0xff]
  %v142 = vld [vmem:[%s0 + $0x3f8] sm:$0xff]
  %v143 = vld [vmem:[%s0 + $0x400] sm:$0xff]
  %v144 = vld [vmem:[%s0 + $0x408] sm:$0xff]
  %v145 = vld [vmem:[%s0 + $0x410] sm:$0xff]
  %v146 = vld [vmem:[%s0 + $0x418] sm:$0xff]
  %v147 = vld [vmem:[%s0 + $0x420] sm:$0xff]
  %v148 = vld [vmem:[%s0 + $0x428] sm:$0xff]
  %v149 = vld [vmem:[%s0 + $0x430] sm:$0xff]
  %v150 = vld [vmem:[%s0 + $0x438] sm:$0xff]
  %v151 = vld [vmem:[%s0 + $0x440] sm:$0xff]
  %v152 = vld [vmem:[%s0 + $0x448] sm:$0xff]
  %v153 = vld [vmem:[%s0 + $0x450] sm:$0xff]
  %v154 = vld [vmem:[%s0 + $0x458] sm:$0xff]
  %v155 = vld [vmem:[%s0 + $0x460] sm:$0xff]
  %v156 = vld [vmem:[%s0 + $0x468] sm:$0xff]
  %v157 = vld [vmem:[%s0 + $0x470] sm:$0xff]
  %v158 = vld [vmem:[%s0 + $0x478] sm:$0xff]
  %v159 = vld [vmem:[%s0 + $0x480] sm:$0xff]
  %v160 = vld [vmem:[%s0 + $0x488] sm:$0xff]
  %v161 = vld [vmem:[%s0 + $0x490] sm:$0xff]
  %v162 = vld [vmem:[%s0 + $0x498] sm:$0xff]
  %v163 = vld [vmem:[%s0 + $0x4a0] sm:$0xff]
  %v164 = vld [vmem:[%s0 + $0x4a8] sm:$0xff]
  %v165 = vld [vmem:[%s0 + $0x4b0] sm:$0xff]
  %v166 = vld [vmem:[%s0 + $0x4b8] sm:$0xff]
  %v167 = vld [vmem:[%s0 + $0x4c0] sm:$0xff]
  %v168 = vld [vmem:[%s0 + $0x4c8] sm:$0xff]
  %v169 = vld [vmem:[%s0 + $0x4d0] sm:$0xff]
  %v170 = vld [vmem:[%s0 + $0x4d8] sm:$0xff]
  %v171 = vld [vmem:[%s0 + $0x4e0] sm:$0xff]
  %v172 = vld [vmem:[%s0 + $0x4e8] sm:$0xff]
  %v173 = vld [vmem:[%s0 + $0x4f0] sm:$0xff]
  %v174 = vld [vmem:[%s0 + $0x4f8] sm:$0xff]
  %v175 = vld [vmem:[%s0 + $0x500] sm:$0xff]
  %v176 = vld [vmem:[%s0 + $0x508] sm:$0xff]
  %v177 = vld [vmem:[%s0 + $0x510] sm:$0xff]
  %v178 = vld [vmem:[%s0 + $0x518] sm:$0xff]
  %v179 = vld [vmem:[%s0 + $0x520] sm:$0xff]
  %v180 = vld [vmem:[%s0 + $0x528] sm:$0xff]
  %v181 = vld [vmem:[%s0 + $0x530] sm:$0xff]
  %v182 = vld [vmem:[%s0 + $0x538] sm:$0xff]
  %v183 = vpack.c.bf16 %v16, %v15
  %v184 = vpack.c.bf16 %v18, %v17
  %v185 = vpack.c.bf16 %v20, %v19
  %v186 = vpack.c.bf16 %v22, %v21
  %v187 = vpack.c.bf16 %v24, %v23
  %v188 = vpack.c.bf16 %v26, %v25
  %v189 = vpack.c.bf16 %v28, %v27
  %v190 = vpack.c.bf16 %v30, %v29
  %v191 = vpack.c.bf16 %v32, %v31
  %v192 = vpack.c.bf16 %v34, %v33
  %v193 = vpack.c.bf16 %v36, %v35
  %v194 = vpack.c.bf16 %v38, %v37
  %v195 = vpack.c.bf16 %v40, %v39
  %v196 = vpack.c.bf16 %v42, %v41
  %v197 = vpack.c.bf16 %v44, %v43
  %v198 = vpack.c.bf16 %v46, %v45
  %v199 = vpack.c.bf16 %v48, %v47
  %v200 = vpack.c.bf16 %v50, %v49
  %v201 = vpack.c.bf16 %v52, %v51
  %v202 = vpack.c.bf16 %v54, %v53
  %v203 = vpack.c.bf16 %v56, %v55
  %v204 = vpack.c.bf16 %v58, %v57
  %v205 = vpack.c.bf16 %v60, %v59
  %v206 = vpack.c.bf16 %v62, %v61
  %v207 = vpack.c.bf16 %v64, %v63
  %v208 = vpack.c.bf16 %v66, %v65
  %v209 = vpack.c.bf16 %v68, %v67
  %v210 = vpack.c.bf16 %v70, %v69
  %v211 = vpack.c.bf16 %v72, %v71
  %v212 = vpack.c.bf16 %v74, %v73
  %v213 = vpack.c.bf16 %v76, %v75
  %v214 = vpack.c.bf16 %v78, %v77
  %v215 = vpack.c.bf16 %v80, %v79
  %v216 = vpack.c.bf16 %v82, %v81
  %v217 = vpack.c.bf16 %v84, %v83
  %v218 = vpack.c.bf16 %v86, %v85
  %v219 = vpack.c.bf16 %v88, %v87
  %v220 = vpack.c.bf16 %v90, %v89
  %v221 = vpack.c.bf16 %v92, %v91
  %v222 = vpack.c.bf16 %v94, %v93
  %v223 = vpack.c.bf16 %v96, %v95
  %v224 = vpack.c.bf16 %v98, %v97
  %v225 = vpack.c.bf16 %v100, %v99
  %v226 = vpack.c.bf16 %v102, %v101
  %v227 = vpack.c.bf16 %v104, %v103
  %v228 = vpack.c.bf16 %v106, %v105
  %v229 = vpack.c.bf16 %v108, %v107
  %v230 = vpack.c.bf16 %v110, %v109
  %v231 = vpack.c.bf16 %v112, %v111
  %v232 = vpack.c.bf16 %v114, %v113
  %v233 = vpack.c.bf16 %v116, %v115
  %v234 = vpack.c.bf16 %v118, %v117
  %v235 = vpack.c.bf16 %v120, %v119
  %v236 = vpack.c.bf16 %v122, %v121
  %v237 = vpack.c.bf16 %v124, %v123
  %v238 = vpack.c.bf16 %v126, %v125
  %v239 = vpack.c.bf16 %v128, %v127
  %v240 = vpack.c.bf16 %v130, %v129
  %v241 = vpack.c.bf16 %v132, %v131
  %v242 = vpack.c.bf16 %v134, %v133
  %v243 = vpack.c.bf16 %v136, %v135
  %v244 = vpack.c.bf16 %v138, %v137
  %v245 = vpack.c.bf16 %v140, %v139
  %v246 = vpack.c.bf16 %v142, %v141
  %v247 = vpack.c.bf16 %v144, %v143
  %v248 = vpack.c.bf16 %v146, %v145
  %v249 = vpack.c.bf16 %v148, %v147
  %v250 = vpack.c.bf16 %v150, %v149
  %v251 = vpack.c.bf16 %v152, %v151
  %v252 = vpack.c.bf16 %v154, %v153
  %v253 = vpack.c.bf16 %v156, %v155
  %v254 = vpack.c.bf16 %v158, %v157
  %v255 = vpack.c.bf16 %v160, %v159
  %v256 = vpack.c.bf16 %v162, %v161
  %v257 = vpack.c.bf16 %v164, %v163
  %v258 = vpack.c.bf16 %v166, %v165
  %v259 = vpack.c.bf16 %v168, %v167
  %v260 = vpack.c.bf16 %v170, %v169
  %v261 = vpack.c.bf16 %v172, %v171
  %v262 = vpack.c.bf16 %v174, %v173
  %v263 = vpack.c.bf16 %v176, %v175
  %v264 = vpack.c.bf16 %v178, %v177
  %v265 = vpack.c.bf16 %v180, %v179
  %v266 = vpack.c.bf16 %v182, %v181
  %v267 = vld [vmem:[%s1] sm:$0xff]
  %v268 = vld [vmem:[%s1 + $0x8] sm:$0xf]
  %v269 = vld [vmem:[%s1 + $0xc] sm:$0xff]
  %v270 = vld [vmem:[%s1 + $0x14] sm:$0xf]
  %v271 = vld [vmem:[%s1 + $0x18] sm:$0xff]
  %v272 = vld [vmem:[%s1 + $0x20] sm:$0xf]
  %v273 = vld [vmem:[%s1 + $0x24] sm:$0xff]
  %v274 = vld [vmem:[%s1 + $0x2c] sm:$0xf]
  %v275 = vld [vmem:[%s1 + $0x30] sm:$0xff]
  %v276 = vld [vmem:[%s1 + $0x38] sm:$0xf]
  %v277 = vld [vmem:[%s1 + $0x3c] sm:$0xff]
  %v278 = vld [vmem:[%s1 + $0x44] sm:$0xf]
  %v279 = vld [vmem:[%s1 + $0x48] sm:$0xff]
  %v280 = vld [vmem:[%s1 + $0x50] sm:$0xf]
  %v281 = vld [vmem:[%s1 + $0x54] sm:$0xff]
  %v282 = vld [vmem:[%s1 + $0x5c] sm:$0xf]
  %v283 = vld [vmem:[%s1 + $0x60] sm:$0xff]
  %v284 = vld [vmem:[%s1 + $0x68] sm:$0xf]
  %v285 = vld [vmem:[%s1 + $0x6c] sm:$0xff]
  %v286 = vld [vmem:[%s1 + $0x74] sm:$0xf]
  %v287 = vld [vmem:[%s1 + $0x78] sm:$0xff]
  %v288 = vld [vmem:[%s1 + $0x80] sm:$0xf]
  %v289 = vld [vmem:[%s1 + $0x84] sm:$0xff]
  %v290 = vld [vmem:[%s1 + $0x8c] sm:$0xf]
  %v291 = vld [vmem:[%s1 + $0x90] sm:$0xff]
  %v292 = vld [vmem:[%s1 + $0x98] sm:$0xf]
  %v293 = vld [vmem:[%s1 + $0x9c] sm:$0xff]
  %v294 = vld [vmem:[%s1 + $0xa4] sm:$0xf]
  %v295 = vld [vmem:[%s1 + $0xa8] sm:$0xff]
  %v296 = vld [vmem:[%s1 + $0xb0] sm:$0xf]
  %v297 = vld [vmem:[%s1 + $0xb4] sm:$0xff]
  %v298 = vld [vmem:[%s1 + $0xbc] sm:$0xf]
  %v299 = vld [vmem:[%s1 + $0xc0] sm:$0xff]
  %v300 = vld [vmem:[%s1 + $0xc8] sm:$0xf]
  %v301 = vld [vmem:[%s1 + $0xcc] sm:$0xff]
  %v302 = vld [vmem:[%s1 + $0xd4] sm:$0xf]
  %v303 = vld [vmem:[%s1 + $0xd8] sm:$0xff]
  %v304 = vld [vmem:[%s1 + $0xe0] sm:$0xf]
  %v305 = vld [vmem:[%s1 + $0xe4] sm:$0xff]
  %v306 = vld [vmem:[%s1 + $0xec] sm:$0xf]
  %v307 = vld [vmem:[%s1 + $0xf0] sm:$0xff]
  %v308 = vld [vmem:[%s1 + $0xf8] sm:$0xf]
  %v309 = vld [vmem:[%s1 + $0xfc] sm:$0xff]
  %v310 = vld [vmem:[%s1 + $0x104] sm:$0xf]
  %v311 = vld [vmem:[%s1 + $0x108] sm:$0xff]
  %v312 = vld [vmem:[%s1 + $0x110] sm:$0xf]
  %v313 = vld [vmem:[%s1 + $0x114] sm:$0xff]
  %v314 = vld [vmem:[%s1 + $0x11c] sm:$0xf]
  %v315 = vld [vmem:[%s1 + $0x120] sm:$0xff]
  %v316 = vld [vmem:[%s1 + $0x128] sm:$0xf]
  %v317 = vld [vmem:[%s1 + $0x12c] sm:$0xff]
  %v318 = vld [vmem:[%s1 + $0x134] sm:$0xf]
  %v319 = vld [vmem:[%s1 + $0x138] sm:$0xff]
  %v320 = vld [vmem:[%s1 + $0x140] sm:$0xf]
  %v321 = vld [vmem:[%s1 + $0x144] sm:$0xff]
  %v322 = vld [vmem:[%s1 + $0x14c] sm:$0xf]
  %v323 = vld [vmem:[%s1 + $0x150] sm:$0xff]
  %v324 = vld [vmem:[%s1 + $0x158] sm:$0xf]
  %v325 = vld [vmem:[%s1 + $0x15c] sm:$0xff]
  %v326 = vld [vmem:[%s1 + $0x164] sm:$0xf]
  %v327 = vld [vmem:[%s1 + $0x168] sm:$0xff]
  %v328 = vld [vmem:[%s1 + $0x170] sm:$0xf]
  %v329 = vld [vmem:[%s1 + $0x174] sm:$0xff]
  %v330 = vld [vmem:[%s1 + $0x17c] sm:$0xf]
  %v331 = vld [vmem:[%s1 + $0x180] sm:$0xff]
  %v332 = vld [vmem:[%s1 + $0x188] sm:$0xf]
  %v333 = vld [vmem:[%s1 + $0x18c] sm:$0xff]
  %v334 = vld [vmem:[%s1 + $0x194] sm:$0xf]
  %v335 = vld [vmem:[%s1 + $0x198] sm:$0xff]
  %v336 = vld [vmem:[%s1 + $0x1a0] sm:$0xf]
  %v337 = vld [vmem:[%s1 + $0x1a4] sm:$0xff]
  %v338 = vld [vmem:[%s1 + $0x1ac] sm:$0xf]
  %v339 = vld [vmem:[%s1 + $0x1b0] sm:$0xff]
  %v340 = vld [vmem:[%s1 + $0x1b8] sm:$0xf]
  %v341 = vld [vmem:[%s1 + $0x1bc] sm:$0xff]
  %v342 = vld [vmem:[%s1 + $0x1c4] sm:$0xf]
  %v343 = vld [vmem:[%s1 + $0x1c8] sm:$0xff]
  %v344 = vld [vmem:[%s1 + $0x1d0] sm:$0xf]
  %v345 = vld [vmem:[%s1 + $0x1d4] sm:$0xff]
  %v346 = vld [vmem:[%s1 + $0x1dc] sm:$0xf]
  %v347 = vld [vmem:[%s1 + $0x1e0] sm:$0xff]
  %v348 = vld [vmem:[%s1 + $0x1e8] sm:$0xf]
  %v349 = vld [vmem:[%s1 + $0x1ec] sm:$0xff]
  %v350 = vld [vmem:[%s1 + $0x1f4] sm:$0xf]
  %v351 = vld [vmem:[%s1 + $0x1f8] sm:$0xff]
  %v352 = vld [vmem:[%s1 + $0x200] sm:$0xf]
  %v353 = vld [vmem:[%s1 + $0x204] sm:$0xff]
  %v354 = vld [vmem:[%s1 + $0x20c] sm:$0xf]
  %v355 = vld [vmem:[%s1 + $0x210] sm:$0xff]
  %v356 = vld [vmem:[%s1 + $0x218] sm:$0xf]
  %v357 = vld [vmem:[%s1 + $0x21c] sm:$0xff]
  %v358 = vld [vmem:[%s1 + $0x224] sm:$0xf]
  %v359 = vld [vmem:[%s1 + $0x228] sm:$0xff]
  %v360 = vld [vmem:[%s1 + $0x230] sm:$0xf]
  %v361 = vld [vmem:[%s1 + $0x234] sm:$0xff]
  %v362 = vld [vmem:[%s1 + $0x23c] sm:$0xf]
  %v363 = vld [vmem:[%s1 + $0x240] sm:$0xff]
  %v364 = vld [vmem:[%s1 + $0x248] sm:$0xf]
  %v365 = vld [vmem:[%s1 + $0x24c] sm:$0xff]
  %v366 = vld [vmem:[%s1 + $0x254] sm:$0xf]
  %v367 = vld [vmem:[%s1 + $0x258] sm:$0xff]
  %v368 = vld [vmem:[%s1 + $0x260] sm:$0xf]
  %v369 = vld [vmem:[%s1 + $0x264] sm:$0xff]
  %v370 = vld [vmem:[%s1 + $0x26c] sm:$0xf]
  %v371 = vld [vmem:[%s1 + $0x270] sm:$0xff]
  %v372 = vld [vmem:[%s1 + $0x278] sm:$0xf]
  %v373 = vld [vmem:[%s1 + $0x27c] sm:$0xff]
  %v374 = vld [vmem:[%s1 + $0x284] sm:$0xf]
  %v375 = vld [vmem:[%s1 + $0x288] sm:$0xff]
  %v376 = vld [vmem:[%s1 + $0x290] sm:$0xf]
  %v377 = vld [vmem:[%s1 + $0x294] sm:$0xff]
  %v378 = vld [vmem:[%s1 + $0x29c] sm:$0xf]
  %v379 = vld [vmem:[%s1 + $0x2a0] sm:$0xff]
  %v380 = vld [vmem:[%s1 + $0x2a8] sm:$0xf]
  %v381 = vld [vmem:[%s1 + $0x2ac] sm:$0xff]
  %v382 = vld [vmem:[%s1 + $0x2b4] sm:$0xf]
  %v383 = vld [vmem:[%s1 + $0x2b8] sm:$0xff]
  %v384 = vld [vmem:[%s1 + $0x2c0] sm:$0xf]
  %v385 = vld [vmem:[%s1 + $0x2c4] sm:$0xff]
  %v386 = vld [vmem:[%s1 + $0x2cc] sm:$0xf]
  %v387 = vld [vmem:[%s1 + $0x2d0] sm:$0xff]
  %v388 = vld [vmem:[%s1 + $0x2d8] sm:$0xf]
  %v389 = vld [vmem:[%s1 + $0x2dc] sm:$0xff]
  %v390 = vld [vmem:[%s1 + $0x2e4] sm:$0xf]
  %v391 = vld [vmem:[%s1 + $0x2e8] sm:$0xff]
  %v392 = vld [vmem:[%s1 + $0x2f0] sm:$0xf]
  %v393 = vld [vmem:[%s1 + $0x2f4] sm:$0xff]
  %v394 = vld [vmem:[%s1 + $0x2fc] sm:$0xf]
  %v395 = vld [vmem:[%s1 + $0x300] sm:$0xff]
  %v396 = vld [vmem:[%s1 + $0x308] sm:$0xf]
  %v397 = vld [vmem:[%s1 + $0x30c] sm:$0xff]
  %v398 = vld [vmem:[%s1 + $0x314] sm:$0xf]
  %v399 = vld [vmem:[%s1 + $0x318] sm:$0xff]
  %v400 = vld [vmem:[%s1 + $0x320] sm:$0xf]
  %v401 = vld [vmem:[%s1 + $0x324] sm:$0xff]
  %v402 = vld [vmem:[%s1 + $0x32c] sm:$0xf]
  %v403 = vld [vmem:[%s1 + $0x330] sm:$0xff]
  %v404 = vld [vmem:[%s1 + $0x338] sm:$0xf]
  %v405 = vld [vmem:[%s1 + $0x33c] sm:$0xff]
  %v406 = vld [vmem:[%s1 + $0x344] sm:$0xf]
  %v407 = vld [vmem:[%s1 + $0x348] sm:$0xff]
  %v408 = vld [vmem:[%s1 + $0x350] sm:$0xf]
  %v409 = vld [vmem:[%s1 + $0x354] sm:$0xff]
  %v410 = vld [vmem:[%s1 + $0x35c] sm:$0xf]
  %v411 = vld [vmem:[%s1 + $0x360] sm:$0xff]
  %v412 = vld [vmem:[%s1 + $0x368] sm:$0xf]
  %v413 = vld [vmem:[%s1 + $0x36c] sm:$0xff]
  %v414 = vld [vmem:[%s1 + $0x374] sm:$0xf]
  %v415 = vld [vmem:[%s1 + $0x378] sm:$0xff]
  %v416 = vld [vmem:[%s1 + $0x380] sm:$0xf]
  %v417 = vld [vmem:[%s1 + $0x384] sm:$0xff]
  %v418 = vld [vmem:[%s1 + $0x38c] sm:$0xf]
  %v419 = vld [vmem:[%s1 + $0x390] sm:$0xff]
  %v420 = vld [vmem:[%s1 + $0x398] sm:$0xf]
  %v421 = vld [vmem:[%s1 + $0x39c] sm:$0xff]
  %v422 = vld [vmem:[%s1 + $0x3a4] sm:$0xf]
  %v423 = vld [vmem:[%s1 + $0x3a8] sm:$0xff]
  %v424 = vld [vmem:[%s1 + $0x3b0] sm:$0xf]
  %v425 = vld [vmem:[%s1 + $0x3b4] sm:$0xff]
  %v426 = vld [vmem:[%s1 + $0x3bc] sm:$0xf]
  %v427 = vld [vmem:[%s1 + $0x3c0] sm:$0xff]
  %v428 = vld [vmem:[%s1 + $0x3c8] sm:$0xf]
  %v429 = vld [vmem:[%s1 + $0x3cc] sm:$0xff]
  %v430 = vld [vmem:[%s1 + $0x3d4] sm:$0xf]
  %v431 = vld [vmem:[%s1 + $0x3d8] sm:$0xff]
  %v432 = vld [vmem:[%s1 + $0x3e0] sm:$0xf]
  %v433 = vld [vmem:[%s1 + $0x3e4] sm:$0xff]
  %v434 = vld [vmem:[%s1 + $0x3ec] sm:$0xf]
  %v435 = vld [vmem:[%s1 + $0x3f0] sm:$0xff]
  %v436 = vld [vmem:[%s1 + $0x3f8] sm:$0xf]
  %v437 = vld [vmem:[%s1 + $0x3fc] sm:$0xff]
  %v438 = vld [vmem:[%s1 + $0x404] sm:$0xf]
  %v439 = vld [vmem:[%s1 + $0x408] sm:$0xff]
  %v440 = vld [vmem:[%s1 + $0x410] sm:$0xf]
  %v441 = vld [vmem:[%s1 + $0x414] sm:$0xff]
  %v442 = vld [vmem:[%s1 + $0x41c] sm:$0xf]
  %v443 = vld [vmem:[%s1 + $0x420] sm:$0xff]
  %v444 = vld [vmem:[%s1 + $0x428] sm:$0xf]
  %v445 = vld [vmem:[%s1 + $0x42c] sm:$0xff]
  %v446 = vld [vmem:[%s1 + $0x434] sm:$0xf]
  %v447 = vld [vmem:[%s1 + $0x438] sm:$0xff]
  %v448 = vld [vmem:[%s1 + $0x440] sm:$0xf]
  %v449 = vld [vmem:[%s1 + $0x444] sm:$0xff]
  %v450 = vld [vmem:[%s1 + $0x44c] sm:$0xf]
  %v451 = vld [vmem:[%s1 + $0x450] sm:$0xff]
  %v452 = vld [vmem:[%s1 + $0x458] sm:$0xf]
  %v453 = vld [vmem:[%s1 + $0x45c] sm:$0xff]
  %v454 = vld [vmem:[%s1 + $0x464] sm:$0xf]
  %v455 = vld [vmem:[%s1 + $0x468] sm:$0xff]
  %v456 = vld [vmem:[%s1 + $0x470] sm:$0xf]
  %v457 = vld [vmem:[%s1 + $0x474] sm:$0xff]
  %v458 = vld [vmem:[%s1 + $0x47c] sm:$0xf]
  %v459 = vld [vmem:[%s1 + $0x480] sm:$0xff]
  %v460 = vld [vmem:[%s1 + $0x488] sm:$0xf]
  %v461 = vld [vmem:[%s1 + $0x48c] sm:$0xff]
  %v462 = vld [vmem:[%s1 + $0x494] sm:$0xf]
  %v463 = vld [vmem:[%s1 + $0x498] sm:$0xff]
  %v464 = vld [vmem:[%s1 + $0x4a0] sm:$0xf]
  %v465 = vld [vmem:[%s1 + $0x4a4] sm:$0xff]
  %v466 = vld [vmem:[%s1 + $0x4ac] sm:$0xf]
  %v467 = vld [vmem:[%s1 + $0x4b0] sm:$0xff]
  %v468 = vld [vmem:[%s1 + $0x4b8] sm:$0xf]
  %v469 = vld [vmem:[%s1 + $0x4bc] sm:$0xff]
  %v470 = vld [vmem:[%s1 + $0x4c4] sm:$0xf]
  %v471 = vld [vmem:[%s1 + $0x4c8] sm:$0xff]
  %v472 = vld [vmem:[%s1 + $0x4d0] sm:$0xf]
  %v473 = vld [vmem:[%s1 + $0x4d4] sm:$0xff]
  %v474 = vld [vmem:[%s1 + $0x4dc] sm:$0xf]
  %v475 = vld [vmem:[%s1 + $0x4e0] sm:$0xff]
  %v476 = vld [vmem:[%s1 + $0x4e8] sm:$0xf]
  %v477 = vld [vmem:[%s1 + $0x4ec] sm:$0xff]
  %v478 = vld [vmem:[%s1 + $0x4f4] sm:$0xf]
  %v479 = vld [vmem:[%s1 + $0x4f8] sm:$0xff]
  %v480 = vld [vmem:[%s1 + $0x500] sm:$0xf]
  %v481 = vld [vmem:[%s1 + $0x504] sm:$0xff]
  %v482 = vld [vmem:[%s1 + $0x50c] sm:$0xf]
  %v483 = vld [vmem:[%s1 + $0x510] sm:$0xff]
  %v484 = vld [vmem:[%s1 + $0x518] sm:$0xf]
  %v485 = vld [vmem:[%s1 + $0x51c] sm:$0xff]
  %v486 = vld [vmem:[%s1 + $0x524] sm:$0xf]
  %v487 = vld [vmem:[%s1 + $0x528] sm:$0xff]
  %v488 = vld [vmem:[%s1 + $0x530] sm:$0xf]
  %v489 = vld [vmem:[%s1 + $0x534] sm:$0xff]
  %v490 = vld [vmem:[%s1 + $0x53c] sm:$0xf]
  %v491 = vld [vmem:[%s1 + $0x540] sm:$0xff]
  %v492 = vld [vmem:[%s1 + $0x548] sm:$0xf]
  %v493 = vld [vmem:[%s1 + $0x54c] sm:$0xff]
  %v494 = vld [vmem:[%s1 + $0x554] sm:$0xf]
  %v495 = vld [vmem:[%s1 + $0x558] sm:$0xff]
  %v496 = vld [vmem:[%s1 + $0x560] sm:$0xf]
  %v497 = vld [vmem:[%s1 + $0x564] sm:$0xff]
  %v498 = vld [vmem:[%s1 + $0x56c] sm:$0xf]
  %v499 = vld [vmem:[%s1 + $0x570] sm:$0xff]
  %v500 = vld [vmem:[%s1 + $0x578] sm:$0xf]
  %v501 = vld [vmem:[%s1 + $0x57c] sm:$0xff]
  %v502 = vld [vmem:[%s1 + $0x584] sm:$0xf]
  %v503 = vld [vmem:[%s1 + $0x588] sm:$0xff]
  %v504 = vld [vmem:[%s1 + $0x590] sm:$0xf]
  %v505 = vld [vmem:[%s1 + $0x594] sm:$0xff]
  %v506 = vld [vmem:[%s1 + $0x59c] sm:$0xf]
  %v507 = vld [vmem:[%s1 + $0x5a0] sm:$0xff]
  %v508 = vld [vmem:[%s1 + $0x5a8] sm:$0xf]
  %v509 = vld [vmem:[%s1 + $0x5ac] sm:$0xff]
  %v510 = vld [vmem:[%s1 + $0x5b4] sm:$0xf]
  %v511 = vld [vmem:[%s1 + $0x5b8] sm:$0xff]
  %v512 = vld [vmem:[%s1 + $0x5c0] sm:$0xf]
  %v513 = vld [vmem:[%s1 + $0x5c4] sm:$0xff]
  %v514 = vld [vmem:[%s1 + $0x5cc] sm:$0xf]
  %v515 = vld [vmem:[%s1 + $0x5d0] sm:$0xff]
  %v516 = vld [vmem:[%s1 + $0x5d8] sm:$0xf]
  %v517 = vld [vmem:[%s1 + $0x5dc] sm:$0xff]
  %v518 = vld [vmem:[%s1 + $0x5e4] sm:$0xf]
  %v519 = vld [vmem:[%s1 + $0x5e8] sm:$0xff]
  %v520 = vld [vmem:[%s1 + $0x5f0] sm:$0xf]
  %v521 = vld [vmem:[%s1 + $0x5f4] sm:$0xff]
  %v522 = vld [vmem:[%s1 + $0x5fc] sm:$0xf]
  %v523 = vld [vmem:[%s1 + $0x600] sm:$0xff]
  %v524 = vld [vmem:[%s1 + $0x608] sm:$0xf]
  %v525 = vld [vmem:[%s1 + $0x60c] sm:$0xff]
  %v526 = vld [vmem:[%s1 + $0x614] sm:$0xf]
  %v527 = vld [vmem:[%s1 + $0x618] sm:$0xff]
  %v528 = vld [vmem:[%s1 + $0x620] sm:$0xf]
  %v529 = vld [vmem:[%s1 + $0x624] sm:$0xff]
  %v530 = vld [vmem:[%s1 + $0x62c] sm:$0xf]
  %v531 = vld [vmem:[%s1 + $0x630] sm:$0xff]
  %v532 = vld [vmem:[%s1 + $0x638] sm:$0xf]
  %v533 = vld [vmem:[%s1 + $0x63c] sm:$0xff]
  %v534 = vld [vmem:[%s1 + $0x644] sm:$0xf]
  %v535 = vld [vmem:[%s1 + $0x648] sm:$0xff]
  %v536 = vld [vmem:[%s1 + $0x650] sm:$0xf]
  %v537 = vld [vmem:[%s1 + $0x654] sm:$0xff]
  %v538 = vld [vmem:[%s1 + $0x65c] sm:$0xf]
  %v539 = vld [vmem:[%s1 + $0x660] sm:$0xff]
  %v540 = vld [vmem:[%s1 + $0x668] sm:$0xf]
  %v541 = vld [vmem:[%s1 + $0x66c] sm:$0xff]
  %v542 = vld [vmem:[%s1 + $0x674] sm:$0xf]
  %v543 = vld [vmem:[%s1 + $0x678] sm:$0xff]
  %v544 = vld [vmem:[%s1 + $0x680] sm:$0xf]
  %v545 = vld [vmem:[%s1 + $0x684] sm:$0xff]
  %v546 = vld [vmem:[%s1 + $0x68c] sm:$0xf]
  %v547 = vld [vmem:[%s1 + $0x690] sm:$0xff]
  %v548 = vld [vmem:[%s1 + $0x698] sm:$0xf]
  %v549 = vld [vmem:[%s1 + $0x69c] sm:$0xff]
  %v550 = vld [vmem:[%s1 + $0x6a4] sm:$0xf]
  %v551 = vld [vmem:[%s1 + $0x6a8] sm:$0xff]
  %v552 = vld [vmem:[%s1 + $0x6b0] sm:$0xf]
  %v553 = vld [vmem:[%s1 + $0x6b4] sm:$0xff]
  %v554 = vld [vmem:[%s1 + $0x6bc] sm:$0xf]
  %v555 = vld [vmem:[%s1 + $0x6c0] sm:$0xff]
  %v556 = vld [vmem:[%s1 + $0x6c8] sm:$0xf]
  %v557 = vld [vmem:[%s1 + $0x6cc] sm:$0xff]
  %v558 = vld [vmem:[%s1 + $0x6d4] sm:$0xf]
  %v559 = vld [vmem:[%s1 + $0x6d8] sm:$0xff]
  %v560 = vld [vmem:[%s1 + $0x6e0] sm:$0xf]
  %v561 = vld [vmem:[%s1 + $0x6e4] sm:$0xff]
  %v562 = vld [vmem:[%s1 + $0x6ec] sm:$0xf]
  %v563 = vld [vmem:[%s1 + $0x6f0] sm:$0xff]
  %v564 = vld [vmem:[%s1 + $0x6f8] sm:$0xf]
  %v565 = vld [vmem:[%s1 + $0x6fc] sm:$0xff]
  %v566 = vld [vmem:[%s1 + $0x704] sm:$0xf]
  %v567 = vld [vmem:[%s1 + $0x708] sm:$0xff]
  %v568 = vld [vmem:[%s1 + $0x710] sm:$0xf]
  %v569 = vld [vmem:[%s1 + $0x714] sm:$0xff]
  %v570 = vld [vmem:[%s1 + $0x71c] sm:$0xf]
  %v571 = vld [vmem:[%s1 + $0x720] sm:$0xff]
  %v572 = vld [vmem:[%s1 + $0x728] sm:$0xf]
  %v573 = vld [vmem:[%s1 + $0x72c] sm:$0xff]
  %v574 = vld [vmem:[%s1 + $0x734] sm:$0xf]
  %v575 = vld [vmem:[%s1 + $0x738] sm:$0xff]
  %v576 = vld [vmem:[%s1 + $0x740] sm:$0xf]
  %v577 = vld [vmem:[%s1 + $0x744] sm:$0xff]
  %v578 = vld [vmem:[%s1 + $0x74c] sm:$0xf]
  %v579 = vld [vmem:[%s1 + $0x750] sm:$0xff]
  %v580 = vld [vmem:[%s1 + $0x758] sm:$0xf]
  %v581 = vld [vmem:[%s1 + $0x75c] sm:$0xff]
  %v582 = vld [vmem:[%s1 + $0x764] sm:$0xf]
  %v583 = vld [vmem:[%s1 + $0x768] sm:$0xff]
  %v584 = vld [vmem:[%s1 + $0x770] sm:$0xf]
  %v585 = vld [vmem:[%s1 + $0x774] sm:$0xff]
  %v586 = vld [vmem:[%s1 + $0x77c] sm:$0xf]
  %v587 = vld [vmem:[%s1 + $0x780] sm:$0xff]
  %v588 = vld [vmem:[%s1 + $0x788] sm:$0xf]
  %v589 = vld [vmem:[%s1 + $0x78c] sm:$0xff]
  %v590 = vld [vmem:[%s1 + $0x794] sm:$0xf]
  %v591 = vld [vmem:[%s1 + $0x798] sm:$0xff]
  %v592 = vld [vmem:[%s1 + $0x7a0] sm:$0xf]
  %v593 = vld [vmem:[%s1 + $0x7a4] sm:$0xff]
  %v594 = vld [vmem:[%s1 + $0x7ac] sm:$0xf]
  %v595 = vld [vmem:[%s1 + $0x7b0] sm:$0xff]
  %v596 = vld [vmem:[%s1 + $0x7b8] sm:$0xf]
  %v597 = vld [vmem:[%s1 + $0x7bc] sm:$0xff]
  %v598 = vld [vmem:[%s1 + $0x7c4] sm:$0xf]
  %v599 = vld [vmem:[%s1 + $0x7c8] sm:$0xff]
  %v600 = vld [vmem:[%s1 + $0x7d0] sm:$0xf]
  %v601 = vld [vmem:[%s1 + $0x7d4] sm:$0xff]
  %v602 = vld [vmem:[%s1 + $0x7dc] sm:$0xf]
  %603 = vxpose.xlu0.c.b16.start [1/8] %v183, 128
  %604 = vxpose.xlu0.c.b16.cont [2/8] %v184, 128
  %605 = vxpose.xlu0.c.b16.cont [3/8] %v185, 128
  %606 = vxpose.xlu0.c.b16.cont [4/8] %v186, 128
  %607 = vxpose.xlu0.c.b16.cont [5/8] %v187, 128
  %608 = vxpose.xlu0.c.b16.cont [6/8] %v188, 128
  %609 = vxpose.xlu0.c.b16.cont [7/8] %v189, 128
  %610 = vxpose.xlu0.c.b16.end [8/8] %v190, 128
  %v611 = vpop.trf.xlu0
  %v612 = vpop.trf.xlu0
  %v613 = vpop.trf.xlu0
  %v614 = vpop.trf.xlu0
  %v615 = vpop.trf.xlu0
  %v616 = vpop.trf.xlu0
  %v617 = vpop.trf.xlu0
  %v618 = vpop.trf.xlu0
  %619 = vxpose.xlu0.c.b16.start [1/8] %v191, 128
  %620 = vxpose.xlu0.c.b16.cont [2/8] %v192, 128
  %621 = vxpose.xlu0.c.b16.cont [3/8] %v193, 128
  %622 = vxpose.xlu0.c.b16.cont [4/8] %v194, 128
  %623 = vxpose.xlu0.c.b16.cont [5/8] %v195, 128
  %624 = vxpose.xlu0.c.b16.cont [6/8] %v196, 128
  %625 = vxpose.xlu0.c.b16.cont [7/8] %v197, 128
  %626 = vxpose.xlu0.c.b16.end [8/8] %v198, 128
  %v627 = vpop.trf.xlu0
  %v628 = vpop.trf.xlu0
  %v629 = vpop.trf.xlu0
  %v630 = vpop.trf.xlu0
  %v631 = vpop.trf.xlu0
  %v632 = vpop.trf.xlu0
  %v633 = vpop.trf.xlu0
  %v634 = vpop.trf.xlu0
  %635 = vxpose.xlu0.c.b16.start [1/8] %v199, 128
  %636 = vxpose.xlu0.c.b16.cont [2/8] %v200, 128
  %637 = vxpose.xlu0.c.b16.cont [3/8] %v201, 128
  %638 = vxpose.xlu0.c.b16.cont [4/8] %v202, 128
  %639 = vxpose.xlu0.c.b16.cont [5/8] %v203, 128
  %640 = vxpose.xlu0.c.b16.cont [6/8] %v204, 128
  %641 = vxpose.xlu0.c.b16.cont [7/8] %v205, 128
  %642 = vxpose.xlu0.c.b16.end [8/8] %v206, 128
  %v643 = vpop.trf.xlu0
  %v644 = vpop.trf.xlu0
  %v645 = vpop.trf.xlu0
  %v646 = vpop.trf.xlu0
  %v647 = vpop.trf.xlu0
  %v648 = vpop.trf.xlu0
  %v649 = vpop.trf.xlu0
  %v650 = vpop.trf.xlu0
  %651 = vxpose.xlu0.c.b16.start [1/8] %v207, 128
  %652 = vxpose.xlu0.c.b16.cont [2/8] %v208, 128
  %653 = vxpose.xlu0.c.b16.cont [3/8] %v209, 128
  %654 = vxpose.xlu0.c.b16.cont [4/8] %v210, 128
  %655 = vxpose.xlu0.c.b16.cont [5/8] %v211, 128
  %656 = vxpose.xlu0.c.b16.cont [6/8] %v212, 128
  %657 = vxpose.xlu0.c.b16.cont [7/8] %v213, 128
  %658 = vxpose.xlu0.c.b16.end [8/8] %v214, 128
  %v659 = vpop.trf.xlu0
  %v660 = vpop.trf.xlu0
  %v661 = vpop.trf.xlu0
  %v662 = vpop.trf.xlu0
  %v663 = vpop.trf.xlu0
  %v664 = vpop.trf.xlu0
  %v665 = vpop.trf.xlu0
  %v666 = vpop.trf.xlu0
  %667 = vxpose.xlu0.c.b16.start [1/8] %v215, 128
  %668 = vxpose.xlu0.c.b16.cont [2/8] %v216, 128
  %669 = vxpose.xlu0.c.b16.cont [3/8] %v217, 128
  %670 = vxpose.xlu0.c.b16.cont [4/8] %v218, 128
  %671 = vxpose.xlu0.c.b16.cont [5/8] %v219, 128
  %672 = vxpose.xlu0.c.b16.cont [6/8] %v220, 128
  %673 = vxpose.xlu0.c.b16.cont [7/8] %v221, 128
  %674 = vxpose.xlu0.c.b16.end [8/8] %v222, 128
  %v675 = vpop.trf.xlu0
  %v676 = vpop.trf.xlu0
  %v677 = vpop.trf.xlu0
  %v678 = vpop.trf.xlu0
  %v679 = vpop.trf.xlu0
  %v680 = vpop.trf.xlu0
  %v681 = vpop.trf.xlu0
  %v682 = vpop.trf.xlu0
  %683 = vxpose.xlu0.c.b16.start [1/8] %v223, 128
  %684 = vxpose.xlu0.c.b16.cont [2/8] %v224, 128
  %685 = vxpose.xlu0.c.b16.cont [3/8] %v225, 128
  %686 = vxpose.xlu0.c.b16.cont [4/8] %v226, 128
  %687 = vxpose.xlu0.c.b16.cont [5/8] %v227, 128
  %688 = vxpose.xlu0.c.b16.cont [6/8] %v228, 128
  %689 = vxpose.xlu0.c.b16.cont [7/8] %v229, 128
  %690 = vxpose.xlu0.c.b16.end [8/8] %v230, 128
  %v691 = vpop.trf.xlu0
  %v692 = vpop.trf.xlu0
  %v693 = vpop.trf.xlu0
  %v694 = vpop.trf.xlu0
  %v695 = vpop.trf.xlu0
  %v696 = vpop.trf.xlu0
  %v697 = vpop.trf.xlu0
  %v698 = vpop.trf.xlu0
  %699 = vxpose.xlu0.c.b16.start [1/8] %v231, 128
  %700 = vxpose.xlu0.c.b16.cont [2/8] %v232, 128
  %701 = vxpose.xlu0.c.b16.cont [3/8] %v233, 128
  %702 = vxpose.xlu0.c.b16.cont [4/8] %v234, 128
  %703 = vxpose.xlu0.c.b16.cont [5/8] %v235, 128
  %704 = vxpose.xlu0.c.b16.cont [6/8] %v236, 128
  %705 = vxpose.xlu0.c.b16.cont [7/8] %v237, 128
  %706 = vxpose.xlu0.c.b16.end [8/8] %v238, 128
  %v707 = vpop.trf.xlu0
  %v708 = vpop.trf.xlu0
  %v709 = vpop.trf.xlu0
  %v710 = vpop.trf.xlu0
  %v711 = vpop.trf.xlu0
  %v712 = vpop.trf.xlu0
  %v713 = vpop.trf.xlu0
  %v714 = vpop.trf.xlu0
  %715 = vxpose.xlu0.c.b16.start [1/8] %v239, 128
  %716 = vxpose.xlu0.c.b16.cont [2/8] %v240, 128
  %717 = vxpose.xlu0.c.b16.cont [3/8] %v241, 128
  %718 = vxpose.xlu0.c.b16.cont [4/8] %v242, 128
  %719 = vxpose.xlu0.c.b16.cont [5/8] %v243, 128
  %720 = vxpose.xlu0.c.b16.cont [6/8] %v244, 128
  %721 = vxpose.xlu0.c.b16.cont [7/8] %v245, 128
  %722 = vxpose.xlu0.c.b16.end [8/8] %v246, 128
  %v723 = vpop.trf.xlu0
  %v724 = vpop.trf.xlu0
  %v725 = vpop.trf.xlu0
  %v726 = vpop.trf.xlu0
  %v727 = vpop.trf.xlu0
  %v728 = vpop.trf.xlu0
  %v729 = vpop.trf.xlu0
  %v730 = vpop.trf.xlu0
  %731 = vxpose.xlu0.c.b16.start [1/8] %v247, 128
  %732 = vxpose.xlu0.c.b16.cont [2/8] %v248, 128
  %733 = vxpose.xlu0.c.b16.cont [3/8] %v249, 128
  %734 = vxpose.xlu0.c.b16.cont [4/8] %v250, 128
  %735 = vxpose.xlu0.c.b16.cont [5/8] %v251, 128
  %736 = vxpose.xlu0.c.b16.cont [6/8] %v252, 128
  %737 = vxpose.xlu0.c.b16.cont [7/8] %v253, 128
  %738 = vxpose.xlu0.c.b16.end [8/8] %v254, 128
  %v739 = vpop.trf.xlu0
  %v740 = vpop.trf.xlu0
  %v741 = vpop.trf.xlu0
  %v742 = vpop.trf.xlu0
  %v743 = vpop.trf.xlu0
  %v744 = vpop.trf.xlu0
  %v745 = vpop.trf.xlu0
  %v746 = vpop.trf.xlu0
  %747 = vxpose.xlu0.c.b16.start [1/8] %v255, 128
  %748 = vxpose.xlu0.c.b16.cont [2/8] %v256, 128
  %749 = vxpose.xlu0.c.b16.cont [3/8] %v257, 128
  %750 = vxpose.xlu0.c.b16.cont [4/8] %v258, 128
  %751 = vxpose.xlu0.c.b16.cont [5/8] %v259, 128
  %752 = vxpose.xlu0.c.b16.cont [6/8] %v260, 128
  %753 = vxpose.xlu0.c.b16.cont [7/8] %v261, 128
  %754 = vxpose.xlu0.c.b16.end [8/8] %v262, 128
  %v755 = vpop.trf.xlu0
  %v756 = vpop.trf.xlu0
  %v757 = vpop.trf.xlu0
  %v758 = vpop.trf.xlu0
  %v759 = vpop.trf.xlu0
  %v760 = vpop.trf.xlu0
  %v761 = vpop.trf.xlu0
  %v762 = vpop.trf.xlu0
  %763 = vxpose.xlu0.c.b16.start [1/8] %v263, 128
  %764 = vxpose.xlu0.c.b16.cont [2/8] %v264, 128
  %765 = vxpose.xlu0.c.b16.cont [3/8] %v265, 128
  %766 = vxpose.xlu0.c.b16.cont [4/8] %v266, 128
  %767 = vxpose.xlu0.c.b16.cont [5/8] 0, 128
  %768 = vxpose.xlu0.c.b16.cont [6/8] 0, 128
  %769 = vxpose.xlu0.c.b16.cont [7/8] 0, 128
  %770 = vxpose.xlu0.c.b16.end [8/8] 0, 128
  %v771 = vpop.trf.xlu0
  %v772 = vpop.trf.xlu0
  %v773 = vpop.trf.xlu0
  %v774 = vpop.trf.xlu0
  %v775 = vpop.trf.xlu0
  %v776 = vpop.trf.xlu0
  %v777 = vpop.trf.xlu0
  %v778 = vpop.trf.xlu0
  %v1115 = vunpack.c.l.b16 %v267
  %v1116 = vunpack.c.h.b16 %v267
  %v1117 = vunpack.c.l.b16 %v268
  %v1118 = vunpack.c.l.b16 %v269
  %v1119 = vunpack.c.h.b16 %v269
  %v1120 = vunpack.c.l.b16 %v270
  %v1121 = vunpack.c.l.b16 %v271
  %v1122 = vunpack.c.h.b16 %v271
  %v1123 = vunpack.c.l.b16 %v272
  %v1124 = vunpack.c.l.b16 %v273
  %v1125 = vunpack.c.h.b16 %v273
  %v1126 = vunpack.c.l.b16 %v274
  %v1127 = vunpack.c.l.b16 %v275
  %v1128 = vunpack.c.h.b16 %v275
  %v1129 = vunpack.c.l.b16 %v276
  %v1130 = vunpack.c.l.b16 %v277
  %v1131 = vunpack.c.h.b16 %v277
  %v1132 = vunpack.c.l.b16 %v278
  %v1133 = vunpack.c.l.b16 %v279
  %v1134 = vunpack.c.h.b16 %v279
  %v1135 = vunpack.c.l.b16 %v280
  %v1136 = vunpack.c.l.b16 %v281
  %v1137 = vunpack.c.h.b16 %v281
  %v1138 = vunpack.c.l.b16 %v282
  %v1139 = vunpack.c.l.b16 %v283
  %v1140 = vunpack.c.h.b16 %v283
  %v1141 = vunpack.c.l.b16 %v284
  %v1142 = vunpack.c.l.b16 %v285
  %v1143 = vunpack.c.h.b16 %v285
  %v1144 = vunpack.c.l.b16 %v286
  %v1145 = vunpack.c.l.b16 %v287
  %v1146 = vunpack.c.h.b16 %v287
  %v1147 = vunpack.c.l.b16 %v288
  %v1148 = vunpack.c.l.b16 %v289
  %v1149 = vunpack.c.h.b16 %v289
  %v1150 = vunpack.c.l.b16 %v290
  %v1151 = vunpack.c.l.b16 %v291
  %v1152 = vunpack.c.h.b16 %v291
  %v1153 = vunpack.c.l.b16 %v292
  %v1154 = vunpack.c.l.b16 %v293
  %v1155 = vunpack.c.h.b16 %v293
  %v1156 = vunpack.c.l.b16 %v294
  %v1157 = vunpack.c.l.b16 %v295
  %v1158 = vunpack.c.h.b16 %v295
  %v1159 = vunpack.c.l.b16 %v296
  %v1160 = vunpack.c.l.b16 %v297
  %v1161 = vunpack.c.h.b16 %v297
  %v1162 = vunpack.c.l.b16 %v298
  %v1163 = vunpack.c.l.b16 %v299
  %v1164 = vunpack.c.h.b16 %v299
  %v1165 = vunpack.c.l.b16 %v300
  %v1166 = vunpack.c.l.b16 %v301
  %v1167 = vunpack.c.h.b16 %v301
  %v1168 = vunpack.c.l.b16 %v302
  %v1169 = vunpack.c.l.b16 %v303
  %v1170 = vunpack.c.h.b16 %v303
  %v1171 = vunpack.c.l.b16 %v304
  %v1172 = vunpack.c.l.b16 %v305
  %v1173 = vunpack.c.h.b16 %v305
  %v1174 = vunpack.c.l.b16 %v306
  %v1175 = vunpack.c.l.b16 %v307
  %v1176 = vunpack.c.h.b16 %v307
  %v1177 = vunpack.c.l.b16 %v308
  %v1178 = vunpack.c.l.b16 %v309
  %v1179 = vunpack.c.h.b16 %v309
  %v1180 = vunpack.c.l.b16 %v310
  %v1181 = vunpack.c.l.b16 %v311
  %v1182 = vunpack.c.h.b16 %v311
  %v1183 = vunpack.c.l.b16 %v312
  %v1184 = vunpack.c.l.b16 %v313
  %v1185 = vunpack.c.h.b16 %v313
  %v1186 = vunpack.c.l.b16 %v314
  %v1187 = vunpack.c.l.b16 %v315
  %v1188 = vunpack.c.h.b16 %v315
  %v1189 = vunpack.c.l.b16 %v316
  %v1190 = vunpack.c.l.b16 %v317
  %v1191 = vunpack.c.h.b16 %v317
  %v1192 = vunpack.c.l.b16 %v318
  %v1193 = vunpack.c.l.b16 %v319
  %v1194 = vunpack.c.h.b16 %v319
  %v1195 = vunpack.c.l.b16 %v320
  %v1196 = vunpack.c.l.b16 %v321
  %v1197 = vunpack.c.h.b16 %v321
  %v1198 = vunpack.c.l.b16 %v322
  %v1199 = vunpack.c.l.b16 %v323
  %v1200 = vunpack.c.h.b16 %v323
  %v1201 = vunpack.c.l.b16 %v324
  %v1202 = vunpack.c.l.b16 %v325
  %v1203 = vunpack.c.h.b16 %v325
  %v1204 = vunpack.c.l.b16 %v326
  %v1205 = vunpack.c.l.b16 %v327
  %v1206 = vunpack.c.h.b16 %v327
  %v1207 = vunpack.c.l.b16 %v328
  %v1208 = vunpack.c.l.b16 %v329
  %v1209 = vunpack.c.h.b16 %v329
  %v1210 = vunpack.c.l.b16 %v330
  %v1211 = vunpack.c.l.b16 %v331
  %v1212 = vunpack.c.h.b16 %v331
  %v1213 = vunpack.c.l.b16 %v332
  %v1214 = vunpack.c.l.b16 %v333
  %v1215 = vunpack.c.h.b16 %v333
  %v1216 = vunpack.c.l.b16 %v334
  %v1217 = vunpack.c.l.b16 %v335
  %v1218 = vunpack.c.h.b16 %v335
  %v1219 = vunpack.c.l.b16 %v336
  %v1220 = vunpack.c.l.b16 %v337
  %v1221 = vunpack.c.h.b16 %v337
  %v1222 = vunpack.c.l.b16 %v338
  %v1223 = vunpack.c.l.b16 %v339
  %v1224 = vunpack.c.h.b16 %v339
  %v1225 = vunpack.c.l.b16 %v340
  %v1226 = vunpack.c.l.b16 %v341
  %v1227 = vunpack.c.h.b16 %v341
  %v1228 = vunpack.c.l.b16 %v342
  %v1229 = vunpack.c.l.b16 %v343
  %v1230 = vunpack.c.h.b16 %v343
  %v1231 = vunpack.c.l.b16 %v344
  %v1232 = vunpack.c.l.b16 %v345
  %v1233 = vunpack.c.h.b16 %v345
  %v1234 = vunpack.c.l.b16 %v346
  %v1235 = vunpack.c.l.b16 %v347
  %v1236 = vunpack.c.h.b16 %v347
  %v1237 = vunpack.c.l.b16 %v348
  %v1238 = vunpack.c.l.b16 %v349
  %v1239 = vunpack.c.h.b16 %v349
  %v1240 = vunpack.c.l.b16 %v350
  %v1241 = vunpack.c.l.b16 %v351
  %v1242 = vunpack.c.h.b16 %v351
  %v1243 = vunpack.c.l.b16 %v352
  %v1244 = vunpack.c.l.b16 %v353
  %v1245 = vunpack.c.h.b16 %v353
  %v1246 = vunpack.c.l.b16 %v354
  %v1247 = vunpack.c.l.b16 %v355
  %v1248 = vunpack.c.h.b16 %v355
  %v1249 = vunpack.c.l.b16 %v356
  %v1250 = vunpack.c.l.b16 %v357
  %v1251 = vunpack.c.h.b16 %v357
  %v1252 = vunpack.c.l.b16 %v358
  %v1253 = vunpack.c.l.b16 %v359
  %v1254 = vunpack.c.h.b16 %v359
  %v1255 = vunpack.c.l.b16 %v360
  %v1256 = vunpack.c.l.b16 %v361
  %v1257 = vunpack.c.h.b16 %v361
  %v1258 = vunpack.c.l.b16 %v362
  %v1259 = vunpack.c.l.b16 %v363
  %v1260 = vunpack.c.h.b16 %v363
  %v1261 = vunpack.c.l.b16 %v364
  %v1262 = vunpack.c.l.b16 %v365
  %v1263 = vunpack.c.h.b16 %v365
  %v1264 = vunpack.c.l.b16 %v366
  %v1265 = vunpack.c.l.b16 %v367
  %v1266 = vunpack.c.h.b16 %v367
  %v1267 = vunpack.c.l.b16 %v368
  %v1268 = vunpack.c.l.b16 %v369
  %v1269 = vunpack.c.h.b16 %v369
  %v1270 = vunpack.c.l.b16 %v370
  %v1271 = vunpack.c.l.b16 %v371
  %v1272 = vunpack.c.h.b16 %v371
  %v1273 = vunpack.c.l.b16 %v372
  %v1274 = vunpack.c.l.b16 %v373
  %v1275 = vunpack.c.h.b16 %v373
  %v1276 = vunpack.c.l.b16 %v374
  %v1277 = vunpack.c.l.b16 %v375
  %v1278 = vunpack.c.h.b16 %v375
  %v1279 = vunpack.c.l.b16 %v376
  %v1280 = vunpack.c.l.b16 %v377
  %v1281 = vunpack.c.h.b16 %v377
  %v1282 = vunpack.c.l.b16 %v378
  %v1283 = vunpack.c.l.b16 %v379
  %v1284 = vunpack.c.h.b16 %v379
  %v1285 = vunpack.c.l.b16 %v380
  %v1286 = vunpack.c.l.b16 %v381
  %v1287 = vunpack.c.h.b16 %v381
  %v1288 = vunpack.c.l.b16 %v382
  %v1289 = vunpack.c.l.b16 %v383
  %v1290 = vunpack.c.h.b16 %v383
  %v1291 = vunpack.c.l.b16 %v384
  %v1292 = vunpack.c.l.b16 %v385
  %v1293 = vunpack.c.h.b16 %v385
  %v1294 = vunpack.c.l.b16 %v386
  %v1295 = vunpack.c.l.b16 %v387
  %v1296 = vunpack.c.h.b16 %v387
  %v1297 = vunpack.c.l.b16 %v388
  %v1298 = vunpack.c.l.b16 %v389
  %v1299 = vunpack.c.h.b16 %v389
  %v1300 = vunpack.c.l.b16 %v390
  %v1301 = vunpack.c.l.b16 %v391
  %v1302 = vunpack.c.h.b16 %v391
  %v1303 = vunpack.c.l.b16 %v392
  %v1304 = vunpack.c.l.b16 %v393
  %v1305 = vunpack.c.h.b16 %v393
  %v1306 = vunpack.c.l.b16 %v394
  %v1307 = vunpack.c.l.b16 %v395
  %v1308 = vunpack.c.h.b16 %v395
  %v1309 = vunpack.c.l.b16 %v396
  %v1310 = vunpack.c.l.b16 %v397
  %v1311 = vunpack.c.h.b16 %v397
  %v1312 = vunpack.c.l.b16 %v398
  %v1313 = vunpack.c.l.b16 %v399
  %v1314 = vunpack.c.h.b16 %v399
  %v1315 = vunpack.c.l.b16 %v400
  %v1316 = vunpack.c.l.b16 %v401
  %v1317 = vunpack.c.h.b16 %v401
  %v1318 = vunpack.c.l.b16 %v402
  %v1319 = vunpack.c.l.b16 %v403
  %v1320 = vunpack.c.h.b16 %v403
  %v1321 = vunpack.c.l.b16 %v404
  %v1322 = vunpack.c.l.b16 %v405
  %v1323 = vunpack.c.h.b16 %v405
  %v1324 = vunpack.c.l.b16 %v406
  %v1325 = vunpack.c.l.b16 %v407
  %v1326 = vunpack.c.h.b16 %v407
  %v1327 = vunpack.c.l.b16 %v408
  %v1328 = vunpack.c.l.b16 %v409
  %v1329 = vunpack.c.h.b16 %v409
  %v1330 = vunpack.c.l.b16 %v410
  %v1331 = vunpack.c.l.b16 %v411
  %v1332 = vunpack.c.h.b16 %v411
  %v1333 = vunpack.c.l.b16 %v412
  %v1334 = vunpack.c.l.b16 %v413
  %v1335 = vunpack.c.h.b16 %v413
  %v1336 = vunpack.c.l.b16 %v414
  %v1337 = vunpack.c.l.b16 %v415
  %v1338 = vunpack.c.h.b16 %v415
  %v1339 = vunpack.c.l.b16 %v416
  %v1340 = vunpack.c.l.b16 %v417
  %v1341 = vunpack.c.h.b16 %v417
  %v1342 = vunpack.c.l.b16 %v418
  %v1343 = vunpack.c.l.b16 %v419
  %v1344 = vunpack.c.h.b16 %v419
  %v1345 = vunpack.c.l.b16 %v420
  %v1346 = vunpack.c.l.b16 %v421
  %v1347 = vunpack.c.h.b16 %v421
  %v1348 = vunpack.c.l.b16 %v422
  %v1349 = vunpack.c.l.b16 %v423
  %v1350 = vunpack.c.h.b16 %v423
  %v1351 = vunpack.c.l.b16 %v424
  %v1352 = vunpack.c.l.b16 %v425
  %v1353 = vunpack.c.h.b16 %v425
  %v1354 = vunpack.c.l.b16 %v426
  %v1355 = vunpack.c.l.b16 %v427
  %v1356 = vunpack.c.h.b16 %v427
  %v1357 = vunpack.c.l.b16 %v428
  %v1358 = vunpack.c.l.b16 %v429
  %v1359 = vunpack.c.h.b16 %v429
  %v1360 = vunpack.c.l.b16 %v430
  %v1361 = vunpack.c.l.b16 %v431
  %v1362 = vunpack.c.h.b16 %v431
  %v1363 = vunpack.c.l.b16 %v432
  %v1364 = vunpack.c.l.b16 %v433
  %v1365 = vunpack.c.h.b16 %v433
  %v1366 = vunpack.c.l.b16 %v434
  %v1367 = vunpack.c.l.b16 %v435
  %v1368 = vunpack.c.h.b16 %v435
  %v1369 = vunpack.c.l.b16 %v436
  %v1370 = vunpack.c.l.b16 %v437
  %v1371 = vunpack.c.h.b16 %v437
  %v1372 = vunpack.c.l.b16 %v438
  %v1373 = vunpack.c.l.b16 %v439
  %v1374 = vunpack.c.h.b16 %v439
  %v1375 = vunpack.c.l.b16 %v440
  %v1376 = vunpack.c.l.b16 %v441
  %v1377 = vunpack.c.h.b16 %v441
  %v1378 = vunpack.c.l.b16 %v442
  %v1379 = vunpack.c.l.b16 %v443
  %v1380 = vunpack.c.h.b16 %v443
  %v1381 = vunpack.c.l.b16 %v444
  %v1382 = vunpack.c.l.b16 %v445
  %v1383 = vunpack.c.h.b16 %v445
  %v1384 = vunpack.c.l.b16 %v446
  %v1385 = vunpack.c.l.b16 %v447
  %v1386 = vunpack.c.h.b16 %v447
  %v1387 = vunpack.c.l.b16 %v448
  %v1388 = vunpack.c.l.b16 %v449
  %v1389 = vunpack.c.h.b16 %v449
  %v1390 = vunpack.c.l.b16 %v450
  %v1391 = vunpack.c.l.b16 %v451
  %v1392 = vunpack.c.h.b16 %v451
  %v1393 = vunpack.c.l.b16 %v452
  %v1394 = vunpack.c.l.b16 %v453
  %v1395 = vunpack.c.h.b16 %v453
  %v1396 = vunpack.c.l.b16 %v454
  %v1397 = vunpack.c.l.b16 %v455
  %v1398 = vunpack.c.h.b16 %v455
  %v1399 = vunpack.c.l.b16 %v456
  %v1400 = vunpack.c.l.b16 %v457
  %v1401 = vunpack.c.h.b16 %v457
  %v1402 = vunpack.c.l.b16 %v458
  %v1403 = vunpack.c.l.b16 %v459
  %v1404 = vunpack.c.h.b16 %v459
  %v1405 = vunpack.c.l.b16 %v460
  %v1406 = vunpack.c.l.b16 %v461
  %v1407 = vunpack.c.h.b16 %v461
  %v1408 = vunpack.c.l.b16 %v462
  %v1409 = vunpack.c.l.b16 %v463
  %v1410 = vunpack.c.h.b16 %v463
  %v1411 = vunpack.c.l.b16 %v464
  %v1412 = vunpack.c.l.b16 %v465
  %v1413 = vunpack.c.h.b16 %v465
  %v1414 = vunpack.c.l.b16 %v466
  %v1415 = vunpack.c.l.b16 %v467
  %v1416 = vunpack.c.h.b16 %v467
  %v1417 = vunpack.c.l.b16 %v468
  %v1418 = vunpack.c.l.b16 %v469
  %v1419 = vunpack.c.h.b16 %v469
  %v1420 = vunpack.c.l.b16 %v470
  %v1421 = vunpack.c.l.b16 %v471
  %v1422 = vunpack.c.h.b16 %v471
  %v1423 = vunpack.c.l.b16 %v472
  %v1424 = vunpack.c.l.b16 %v473
  %v1425 = vunpack.c.h.b16 %v473
  %v1426 = vunpack.c.l.b16 %v474
  %v1427 = vunpack.c.l.b16 %v475
  %v1428 = vunpack.c.h.b16 %v475
  %v1429 = vunpack.c.l.b16 %v476
  %v1430 = vunpack.c.l.b16 %v477
  %v1431 = vunpack.c.h.b16 %v477
  %v1432 = vunpack.c.l.b16 %v478
  %v1433 = vunpack.c.l.b16 %v479
  %v1434 = vunpack.c.h.b16 %v479
  %v1435 = vunpack.c.l.b16 %v480
  %v1436 = vunpack.c.l.b16 %v481
  %v1437 = vunpack.c.h.b16 %v481
  %v1438 = vunpack.c.l.b16 %v482
  %v1439 = vunpack.c.l.b16 %v483
  %v1440 = vunpack.c.h.b16 %v483
  %v1441 = vunpack.c.l.b16 %v484
  %v1442 = vunpack.c.l.b16 %v485
  %v1443 = vunpack.c.h.b16 %v485
  %v1444 = vunpack.c.l.b16 %v486
  %v1445 = vunpack.c.l.b16 %v487
  %v1446 = vunpack.c.h.b16 %v487
  %v1447 = vunpack.c.l.b16 %v488
  %v1448 = vunpack.c.l.b16 %v489
  %v1449 = vunpack.c.h.b16 %v489
  %v1450 = vunpack.c.l.b16 %v490
  %v1451 = vunpack.c.l.b16 %v491
  %v1452 = vunpack.c.h.b16 %v491
  %v1453 = vunpack.c.l.b16 %v492
  %v1454 = vunpack.c.l.b16 %v493
  %v1455 = vunpack.c.h.b16 %v493
  %v1456 = vunpack.c.l.b16 %v494
  %v1457 = vunpack.c.l.b16 %v495
  %v1458 = vunpack.c.h.b16 %v495
  %v1459 = vunpack.c.l.b16 %v496
  %v1460 = vunpack.c.l.b16 %v497
  %v1461 = vunpack.c.h.b16 %v497
  %v1462 = vunpack.c.l.b16 %v498
  %v1463 = vunpack.c.l.b16 %v499
  %v1464 = vunpack.c.h.b16 %v499
  %v1465 = vunpack.c.l.b16 %v500
  %v1466 = vunpack.c.l.b16 %v501
  %v1467 = vunpack.c.h.b16 %v501
  %v1468 = vunpack.c.l.b16 %v502
  %v1469 = vunpack.c.l.b16 %v503
  %v1470 = vunpack.c.h.b16 %v503
  %v1471 = vunpack.c.l.b16 %v504
  %v1472 = vunpack.c.l.b16 %v505
  %v1473 = vunpack.c.h.b16 %v505
  %v1474 = vunpack.c.l.b16 %v506
  %v1475 = vunpack.c.l.b16 %v507
  %v1476 = vunpack.c.h.b16 %v507
  %v1477 = vunpack.c.l.b16 %v508
  %v1478 = vunpack.c.l.b16 %v509
  %v1479 = vunpack.c.h.b16 %v509
  %v1480 = vunpack.c.l.b16 %v510
  %v1481 = vunpack.c.l.b16 %v511
  %v1482 = vunpack.c.h.b16 %v511
  %v1483 = vunpack.c.l.b16 %v512
  %v1484 = vunpack.c.l.b16 %v513
  %v1485 = vunpack.c.h.b16 %v513
  %v1486 = vunpack.c.l.b16 %v514
  %v1487 = vunpack.c.l.b16 %v515
  %v1488 = vunpack.c.h.b16 %v515
  %v1489 = vunpack.c.l.b16 %v516
  %v1490 = vunpack.c.l.b16 %v517
  %v1491 = vunpack.c.h.b16 %v517
  %v1492 = vunpack.c.l.b16 %v518
  %v1493 = vunpack.c.l.b16 %v519
  %v1494 = vunpack.c.h.b16 %v519
  %v1495 = vunpack.c.l.b16 %v520
  %v1496 = vunpack.c.l.b16 %v521
  %v1497 = vunpack.c.h.b16 %v521
  %v1498 = vunpack.c.l.b16 %v522
  %v1499 = vunpack.c.l.b16 %v523
  %v1500 = vunpack.c.h.b16 %v523
  %v1501 = vunpack.c.l.b16 %v524
  %v1502 = vunpack.c.l.b16 %v525
  %v1503 = vunpack.c.h.b16 %v525
  %v1504 = vunpack.c.l.b16 %v526
  %v1505 = vunpack.c.l.b16 %v527
  %v1506 = vunpack.c.h.b16 %v527
  %v1507 = vunpack.c.l.b16 %v528
  %v1508 = vunpack.c.l.b16 %v529
  %v1509 = vunpack.c.h.b16 %v529
  %v1510 = vunpack.c.l.b16 %v530
  %v1511 = vunpack.c.l.b16 %v531
  %v1512 = vunpack.c.h.b16 %v531
  %v1513 = vunpack.c.l.b16 %v532
  %v1514 = vunpack.c.l.b16 %v533
  %v1515 = vunpack.c.h.b16 %v533
  %v1516 = vunpack.c.l.b16 %v534
  %v1517 = vunpack.c.l.b16 %v535
  %v1518 = vunpack.c.h.b16 %v535
  %v1519 = vunpack.c.l.b16 %v536
  %v1520 = vunpack.c.l.b16 %v537
  %v1521 = vunpack.c.h.b16 %v537
  %v1522 = vunpack.c.l.b16 %v538
  %v1523 = vunpack.c.l.b16 %v539
  %v1524 = vunpack.c.h.b16 %v539
  %v1525 = vunpack.c.l.b16 %v540
  %v1526 = vunpack.c.l.b16 %v541
  %v1527 = vunpack.c.h.b16 %v541
  %v1528 = vunpack.c.l.b16 %v542
  %v1529 = vunpack.c.l.b16 %v543
  %v1530 = vunpack.c.h.b16 %v543
  %v1531 = vunpack.c.l.b16 %v544
  %v1532 = vunpack.c.l.b16 %v545
  %v1533 = vunpack.c.h.b16 %v545
  %v1534 = vunpack.c.l.b16 %v546
  %v1535 = vunpack.c.l.b16 %v547
  %v1536 = vunpack.c.h.b16 %v547
  %v1537 = vunpack.c.l.b16 %v548
  %v1538 = vunpack.c.l.b16 %v549
  %v1539 = vunpack.c.h.b16 %v549
  %v1540 = vunpack.c.l.b16 %v550
  %v1541 = vunpack.c.l.b16 %v551
  %v1542 = vunpack.c.h.b16 %v551
  %v1543 = vunpack.c.l.b16 %v552
  %v1544 = vunpack.c.l.b16 %v553
  %v1545 = vunpack.c.h.b16 %v553
  %v1546 = vunpack.c.l.b16 %v554
  %v1547 = vunpack.c.l.b16 %v555
  %v1548 = vunpack.c.h.b16 %v555
  %v1549 = vunpack.c.l.b16 %v556
  %v1550 = vunpack.c.l.b16 %v557
  %v1551 = vunpack.c.h.b16 %v557
  %v1552 = vunpack.c.l.b16 %v558
  %v1553 = vunpack.c.l.b16 %v559
  %v1554 = vunpack.c.h.b16 %v559
  %v1555 = vunpack.c.l.b16 %v560
  %v1556 = vunpack.c.l.b16 %v561
  %v1557 = vunpack.c.h.b16 %v561
  %v1558 = vunpack.c.l.b16 %v562
  %v1559 = vunpack.c.l.b16 %v563
  %v1560 = vunpack.c.h.b16 %v563
  %v1561 = vunpack.c.l.b16 %v564
  %v1562 = vunpack.c.l.b16 %v565
  %v1563 = vunpack.c.h.b16 %v565
  %v1564 = vunpack.c.l.b16 %v566
  %v1565 = vunpack.c.l.b16 %v567
  %v1566 = vunpack.c.h.b16 %v567
  %v1567 = vunpack.c.l.b16 %v568
  %v1568 = vunpack.c.l.b16 %v569
  %v1569 = vunpack.c.h.b16 %v569
  %v1570 = vunpack.c.l.b16 %v570
  %v1571 = vunpack.c.l.b16 %v571
  %v1572 = vunpack.c.h.b16 %v571
  %v1573 = vunpack.c.l.b16 %v572
  %v1574 = vunpack.c.l.b16 %v573
  %v1575 = vunpack.c.h.b16 %v573
  %v1576 = vunpack.c.l.b16 %v574
  %v1577 = vunpack.c.l.b16 %v575
  %v1578 = vunpack.c.h.b16 %v575
  %v1579 = vunpack.c.l.b16 %v576
  %v1580 = vunpack.c.l.b16 %v577
  %v1581 = vunpack.c.h.b16 %v577
  %v1582 = vunpack.c.l.b16 %v578
  %v1583 = vunpack.c.l.b16 %v579
  %v1584 = vunpack.c.h.b16 %v579
  %v1585 = vunpack.c.l.b16 %v580
  %v1586 = vunpack.c.l.b16 %v581
  %v1587 = vunpack.c.h.b16 %v581
  %v1588 = vunpack.c.l.b16 %v582
  %v1589 = vunpack.c.l.b16 %v583
  %v1590 = vunpack.c.h.b16 %v583
  %v1591 = vunpack.c.l.b16 %v584
  %v1592 = vunpack.c.l.b16 %v585
  %v1593 = vunpack.c.h.b16 %v585
  %v1594 = vunpack.c.l.b16 %v586
  %v1595 = vunpack.c.l.b16 %v587
  %v1596 = vunpack.c.h.b16 %v587
  %v1597 = vunpack.c.l.b16 %v588
  %v1598 = vunpack.c.l.b16 %v589
  %v1599 = vunpack.c.h.b16 %v589
  %v1600 = vunpack.c.l.b16 %v590
  %v1601 = vunpack.c.l.b16 %v591
  %v1602 = vunpack.c.h.b16 %v591
  %v1603 = vunpack.c.l.b16 %v592
  %v1604 = vunpack.c.l.b16 %v593
  %v1605 = vunpack.c.h.b16 %v593
  %v1606 = vunpack.c.l.b16 %v594
  %v1607 = vunpack.c.l.b16 %v595
  %v1608 = vunpack.c.h.b16 %v595
  %v1609 = vunpack.c.l.b16 %v596
  %v1610 = vunpack.c.l.b16 %v597
  %v1611 = vunpack.c.h.b16 %v597
  %v1612 = vunpack.c.l.b16 %v598
  %v1613 = vunpack.c.l.b16 %v599
  %v1614 = vunpack.c.h.b16 %v599
  %v1615 = vunpack.c.l.b16 %v600
  %v1616 = vunpack.c.l.b16 %v601
  %v1617 = vunpack.c.h.b16 %v601
  %v1618 = vunpack.c.l.b16 %v602
  %v1619 = vpack.c.b16 %v1118, %v1115
  %v1620 = vpack.c.b16 %v1119, %v1116
  %v1621 = vpack.c.b16 %v1120, %v1117
  %v1622 = vpack.c.b16 %v1124, %v1121
  %v1623 = vpack.c.b16 %v1125, %v1122
  %v1624 = vpack.c.b16 %v1126, %v1123
  %v1625 = vpack.c.b16 %v1130, %v1127
  %v1626 = vpack.c.b16 %v1131, %v1128
  %v1627 = vpack.c.b16 %v1132, %v1129
  %v1628 = vpack.c.b16 %v1136, %v1133
  %v1629 = vpack.c.b16 %v1137, %v1134
  %v1630 = vpack.c.b16 %v1138, %v1135
  %v1631 = vpack.c.b16 %v1142, %v1139
  %v1632 = vpack.c.b16 %v1143, %v1140
  %v1633 = vpack.c.b16 %v1144, %v1141
  %v1634 = vpack.c.b16 %v1148, %v1145
  %v1635 = vpack.c.b16 %v1149, %v1146
  %v1636 = vpack.c.b16 %v1150, %v1147
  %v1637 = vpack.c.b16 %v1154, %v1151
  %v1638 = vpack.c.b16 %v1155, %v1152
  %v1639 = vpack.c.b16 %v1156, %v1153
  %v1640 = vpack.c.b16 %v1160, %v1157
  %v1641 = vpack.c.b16 %v1161, %v1158
  %v1642 = vpack.c.b16 %v1162, %v1159
  %v1643 = vpack.c.b16 %v1166, %v1163
  %v1644 = vpack.c.b16 %v1167, %v1164
  %v1645 = vpack.c.b16 %v1168, %v1165
  %v1646 = vpack.c.b16 %v1172, %v1169
  %v1647 = vpack.c.b16 %v1173, %v1170
  %v1648 = vpack.c.b16 %v1174, %v1171
  %v1649 = vpack.c.b16 %v1178, %v1175
  %v1650 = vpack.c.b16 %v1179, %v1176
  %v1651 = vpack.c.b16 %v1180, %v1177
  %v1652 = vpack.c.b16 %v1184, %v1181
  %v1653 = vpack.c.b16 %v1185, %v1182
  %v1654 = vpack.c.b16 %v1186, %v1183
  %v1655 = vpack.c.b16 %v1190, %v1187
  %v1656 = vpack.c.b16 %v1191, %v1188
  %v1657 = vpack.c.b16 %v1192, %v1189
  %v1658 = vpack.c.b16 %v1196, %v1193
  %v1659 = vpack.c.b16 %v1197, %v1194
  %v1660 = vpack.c.b16 %v1198, %v1195
  %v1661 = vpack.c.b16 %v1202, %v1199
  %v1662 = vpack.c.b16 %v1203, %v1200
  %v1663 = vpack.c.b16 %v1204, %v1201
  %v1664 = vpack.c.b16 %v1208, %v1205
  %v1665 = vpack.c.b16 %v1209, %v1206
  %v1666 = vpack.c.b16 %v1210, %v1207
  %v1667 = vpack.c.b16 %v1214, %v1211
  %v1668 = vpack.c.b16 %v1215, %v1212
  %v1669 = vpack.c.b16 %v1216, %v1213
  %v1670 = vpack.c.b16 %v1220, %v1217
  %v1671 = vpack.c.b16 %v1221, %v1218
  %v1672 = vpack.c.b16 %v1222, %v1219
  %v1673 = vpack.c.b16 %v1226, %v1223
  %v1674 = vpack.c.b16 %v1227, %v1224
  %v1675 = vpack.c.b16 %v1228, %v1225
  %v1676 = vpack.c.b16 %v1232, %v1229
  %v1677 = vpack.c.b16 %v1233, %v1230
  %v1678 = vpack.c.b16 %v1234, %v1231
  %v1679 = vpack.c.b16 %v1238, %v1235
  %v1680 = vpack.c.b16 %v1239, %v1236
  %v1681 = vpack.c.b16 %v1240, %v1237
  %v1682 = vpack.c.b16 %v1244, %v1241
  %v1683 = vpack.c.b16 %v1245, %v1242
  %v1684 = vpack.c.b16 %v1246, %v1243
  %v1685 = vpack.c.b16 %v1250, %v1247
  %v1686 = vpack.c.b16 %v1251, %v1248
  %v1687 = vpack.c.b16 %v1252, %v1249
  %v1688 = vpack.c.b16 %v1256, %v1253
  %v1689 = vpack.c.b16 %v1257, %v1254
  %v1690 = vpack.c.b16 %v1258, %v1255
  %v1691 = vpack.c.b16 %v1262, %v1259
  %v1692 = vpack.c.b16 %v1263, %v1260
  %v1693 = vpack.c.b16 %v1264, %v1261
  %v1694 = vpack.c.b16 %v1268, %v1265
  %v1695 = vpack.c.b16 %v1269, %v1266
  %v1696 = vpack.c.b16 %v1270, %v1267
  %v1697 = vpack.c.b16 %v1274, %v1271
  %v1698 = vpack.c.b16 %v1275, %v1272
  %v1699 = vpack.c.b16 %v1276, %v1273
  %v1700 = vpack.c.b16 %v1280, %v1277
  %v1701 = vpack.c.b16 %v1281, %v1278
  %v1702 = vpack.c.b16 %v1282, %v1279
  %v1703 = vpack.c.b16 %v1286, %v1283
  %v1704 = vpack.c.b16 %v1287, %v1284
  %v1705 = vpack.c.b16 %v1288, %v1285
  %v1706 = vpack.c.b16 %v1292, %v1289
  %v1707 = vpack.c.b16 %v1293, %v1290
  %v1708 = vpack.c.b16 %v1294, %v1291
  %v1709 = vpack.c.b16 %v1298, %v1295
  %v1710 = vpack.c.b16 %v1299, %v1296
  %v1711 = vpack.c.b16 %v1300, %v1297
  %v1712 = vpack.c.b16 %v1304, %v1301
  %v1713 = vpack.c.b16 %v1305, %v1302
  %v1714 = vpack.c.b16 %v1306, %v1303
  %v1715 = vpack.c.b16 %v1310, %v1307
  %v1716 = vpack.c.b16 %v1311, %v1308
  %v1717 = vpack.c.b16 %v1312, %v1309
  %v1718 = vpack.c.b16 %v1316, %v1313
  %v1719 = vpack.c.b16 %v1317, %v1314
  %v1720 = vpack.c.b16 %v1318, %v1315
  %v1721 = vpack.c.b16 %v1322, %v1319
  %v1722 = vpack.c.b16 %v1323, %v1320
  %v1723 = vpack.c.b16 %v1324, %v1321
  %v1724 = vpack.c.b16 %v1328, %v1325
  %v1725 = vpack.c.b16 %v1329, %v1326
  %v1726 = vpack.c.b16 %v1330, %v1327
  %v1727 = vpack.c.b16 %v1334, %v1331
  %v1728 = vpack.c.b16 %v1335, %v1332
  %v1729 = vpack.c.b16 %v1336, %v1333
  %v1730 = vpack.c.b16 %v1340, %v1337
  %v1731 = vpack.c.b16 %v1341, %v1338
  %v1732 = vpack.c.b16 %v1342, %v1339
  %v1733 = vpack.c.b16 %v1346, %v1343
  %v1734 = vpack.c.b16 %v1347, %v1344
  %v1735 = vpack.c.b16 %v1348, %v1345
  %v1736 = vpack.c.b16 %v1352, %v1349
  %v1737 = vpack.c.b16 %v1353, %v1350
  %v1738 = vpack.c.b16 %v1354, %v1351
  %v1739 = vpack.c.b16 %v1358, %v1355
  %v1740 = vpack.c.b16 %v1359, %v1356
  %v1741 = vpack.c.b16 %v1360, %v1357
  %v1742 = vpack.c.b16 %v1364, %v1361
  %v1743 = vpack.c.b16 %v1365, %v1362
  %v1744 = vpack.c.b16 %v1366, %v1363
  %v1745 = vpack.c.b16 %v1370, %v1367
  %v1746 = vpack.c.b16 %v1371, %v1368
  %v1747 = vpack.c.b16 %v1372, %v1369
  %v1748 = vpack.c.b16 %v1376, %v1373
  %v1749 = vpack.c.b16 %v1377, %v1374
  %v1750 = vpack.c.b16 %v1378, %v1375
  %v1751 = vpack.c.b16 %v1382, %v1379
  %v1752 = vpack.c.b16 %v1383, %v1380
  %v1753 = vpack.c.b16 %v1384, %v1381
  %v1754 = vpack.c.b16 %v1388, %v1385
  %v1755 = vpack.c.b16 %v1389, %v1386
  %v1756 = vpack.c.b16 %v1390, %v1387
  %v1757 = vpack.c.b16 %v1394, %v1391
  %v1758 = vpack.c.b16 %v1395, %v1392
  %v1759 = vpack.c.b16 %v1396, %v1393
  %v1760 = vpack.c.b16 %v1400, %v1397
  %v1761 = vpack.c.b16 %v1401, %v1398
  %v1762 = vpack.c.b16 %v1402, %v1399
  %v1763 = vpack.c.b16 %v1406, %v1403
  %v1764 = vpack.c.b16 %v1407, %v1404
  %v1765 = vpack.c.b16 %v1408, %v1405
  %v1766 = vpack.c.b16 %v1412, %v1409
  %v1767 = vpack.c.b16 %v1413, %v1410
  %v1768 = vpack.c.b16 %v1414, %v1411
  %v1769 = vpack.c.b16 %v1418, %v1415
  %v1770 = vpack.c.b16 %v1419, %v1416
  %v1771 = vpack.c.b16 %v1420, %v1417
  %v1772 = vpack.c.b16 %v1424, %v1421
  %v1773 = vpack.c.b16 %v1425, %v1422
  %v1774 = vpack.c.b16 %v1426, %v1423
  %v1775 = vpack.c.b16 %v1430, %v1427
  %v1776 = vpack.c.b16 %v1431, %v1428
  %v1777 = vpack.c.b16 %v1432, %v1429
  %v1778 = vpack.c.b16 %v1436, %v1433
  %v1779 = vpack.c.b16 %v1437, %v1434
  %v1780 = vpack.c.b16 %v1438, %v1435
  %v1781 = vpack.c.b16 %v1442, %v1439
  %v1782 = vpack.c.b16 %v1443, %v1440
  %v1783 = vpack.c.b16 %v1444, %v1441
  %v1784 = vpack.c.b16 %v1448, %v1445
  %v1785 = vpack.c.b16 %v1449, %v1446
  %v1786 = vpack.c.b16 %v1450, %v1447
  %v1787 = vpack.c.b16 %v1454, %v1451
  %v1788 = vpack.c.b16 %v1455, %v1452
  %v1789 = vpack.c.b16 %v1456, %v1453
  %v1790 = vpack.c.b16 %v1460, %v1457
  %v1791 = vpack.c.b16 %v1461, %v1458
  %v1792 = vpack.c.b16 %v1462, %v1459
  %v1793 = vpack.c.b16 %v1466, %v1463
  %v1794 = vpack.c.b16 %v1467, %v1464
  %v1795 = vpack.c.b16 %v1468, %v1465
  %v1796 = vpack.c.b16 %v1472, %v1469
  %v1797 = vpack.c.b16 %v1473, %v1470
  %v1798 = vpack.c.b16 %v1474, %v1471
  %v1799 = vpack.c.b16 %v1478, %v1475
  %v1800 = vpack.c.b16 %v1479, %v1476
  %v1801 = vpack.c.b16 %v1480, %v1477
  %v1802 = vpack.c.b16 %v1484, %v1481
  %v1803 = vpack.c.b16 %v1485, %v1482
  %v1804 = vpack.c.b16 %v1486, %v1483
  %v1805 = vpack.c.b16 %v1490, %v1487
  %v1806 = vpack.c.b16 %v1491, %v1488
  %v1807 = vpack.c.b16 %v1492, %v1489
  %v1808 = vpack.c.b16 %v1496, %v1493
  %v1809 = vpack.c.b16 %v1497, %v1494
  %v1810 = vpack.c.b16 %v1498, %v1495
  %v1811 = vpack.c.b16 %v1502, %v1499
  %v1812 = vpack.c.b16 %v1503, %v1500
  %v1813 = vpack.c.b16 %v1504, %v1501
  %v1814 = vpack.c.b16 %v1508, %v1505
  %v1815 = vpack.c.b16 %v1509, %v1506
  %v1816 = vpack.c.b16 %v1510, %v1507
  %v1817 = vpack.c.b16 %v1514, %v1511
  %v1818 = vpack.c.b16 %v1515, %v1512
  %v1819 = vpack.c.b16 %v1516, %v1513
  %v1820 = vpack.c.b16 %v1520, %v1517
  %v1821 = vpack.c.b16 %v1521, %v1518
  %v1822 = vpack.c.b16 %v1522, %v1519
  %v1823 = vpack.c.b16 %v1526, %v1523
  %v1824 = vpack.c.b16 %v1527, %v1524
  %v1825 = vpack.c.b16 %v1528, %v1525
  %v1826 = vpack.c.b16 %v1532, %v1529
  %v1827 = vpack.c.b16 %v1533, %v1530
  %v1828 = vpack.c.b16 %v1534, %v1531
  %v1829 = vpack.c.b16 %v1538, %v1535
  %v1830 = vpack.c.b16 %v1539, %v1536
  %v1831 = vpack.c.b16 %v1540, %v1537
  %v1832 = vpack.c.b16 %v1544, %v1541
  %v1833 = vpack.c.b16 %v1545, %v1542
  %v1834 = vpack.c.b16 %v1546, %v1543
  %v1835 = vpack.c.b16 %v1550, %v1547
  %v1836 = vpack.c.b16 %v1551, %v1548
  %v1837 = vpack.c.b16 %v1552, %v1549
  %v1838 = vpack.c.b16 %v1556, %v1553
  %v1839 = vpack.c.b16 %v1557, %v1554
  %v1840 = vpack.c.b16 %v1558, %v1555
  %v1841 = vpack.c.b16 %v1562, %v1559
  %v1842 = vpack.c.b16 %v1563, %v1560
  %v1843 = vpack.c.b16 %v1564, %v1561
  %v1844 = vpack.c.b16 %v1568, %v1565
  %v1845 = vpack.c.b16 %v1569, %v1566
  %v1846 = vpack.c.b16 %v1570, %v1567
  %v1847 = vpack.c.b16 %v1574, %v1571
  %v1848 = vpack.c.b16 %v1575, %v1572
  %v1849 = vpack.c.b16 %v1576, %v1573
  %v1850 = vpack.c.b16 %v1580, %v1577
  %v1851 = vpack.c.b16 %v1581, %v1578
  %v1852 = vpack.c.b16 %v1582, %v1579
  %v1853 = vpack.c.b16 %v1586, %v1583
  %v1854 = vpack.c.b16 %v1587, %v1584
  %v1855 = vpack.c.b16 %v1588, %v1585
  %v1856 = vpack.c.b16 %v1592, %v1589
  %v1857 = vpack.c.b16 %v1593, %v1590
  %v1858 = vpack.c.b16 %v1594, %v1591
  %v1859 = vpack.c.b16 %v1598, %v1595
  %v1860 = vpack.c.b16 %v1599, %v1596
  %v1861 = vpack.c.b16 %v1600, %v1597
  %v1862 = vpack.c.b16 %v1604, %v1601
  %v1863 = vpack.c.b16 %v1605, %v1602
  %v1864 = vpack.c.b16 %v1606, %v1603
  %v1865 = vpack.c.b16 %v1610, %v1607
  %v1866 = vpack.c.b16 %v1611, %v1608
  %v1867 = vpack.c.b16 %v1612, %v1609
  %v1868 = vpack.c.b16 %v1616, %v1613
  %v1869 = vpack.c.b16 %v1617, %v1614
  %v1870 = vpack.c.b16 %v1618, %v1615
  %vm2123 = vcmask 523264
  %v2125 = vsel %vm2123, %v771, 0
  %v2128 = vsel %vm2123, %v772, 0
  %v2131 = vsel %vm2123, %v773, 0
  %v2134 = vsel %vm2123, %v774, 0
  %2136 = vmatprep.subr.bf16.mxu0 %v1641
  %2137 = vmatpush1.bf16.msra.mxu0 %v1640
  %2138 = vmatprep.subr.bf16.mxu0 %v1638
  %2139 = vmatpush1.bf16.msra.mxu0 %v1637
  %2140 = vmatprep.subr.bf16.mxu0 %v1635
  %2141 = vmatpush1.bf16.msra.mxu0 %v1634
  %2142 = vmatprep.subr.bf16.mxu0 %v1632
  %2143 = vmatpush1.bf16.msra.mxu0 %v1631
  %2144 = vmatprep.subr.bf16.mxu0 %v1629
  %2145 = vmatpush1.bf16.msra.mxu0 %v1628
  %2146 = vmatprep.subr.bf16.mxu0 %v1626
  %2147 = vmatpush1.bf16.msra.mxu0 %v1625
  %2148 = vmatprep.subr.bf16.mxu0 %v1623
  %2149 = vmatpush1.bf16.msra.mxu0 %v1622
  %2150 = vmatprep.subr.bf16.mxu0 %v1620
  %2151 = vmatpush1.bf16.msra.mxu0 %v1619
  %2152 = vmatprep.subr.bf16.mxu0 %v1665
  %2153 = vmatpush2.bf16.msra.mxu0 %v1664
  %2154 = vmatprep.subr.bf16.mxu0 %v1662
  %2155 = vmatpush2.bf16.msra.mxu0 %v1661
  %2156 = vmatprep.subr.bf16.mxu0 %v1659
  %2157 = vmatpush2.bf16.msra.mxu0 %v1658
  %2158 = vmatprep.subr.bf16.mxu0 %v1656
  %2159 = vmatpush2.bf16.msra.mxu0 %v1655
  %2160 = vmatprep.subr.bf16.mxu0 %v1653
  %2161 = vmatpush2.bf16.msra.mxu0 %v1652
  %2162 = vmatprep.subr.bf16.mxu0 %v1650
  %2163 = vmatpush2.bf16.msra.mxu0 %v1649
  %2164 = vmatprep.subr.bf16.mxu0 %v1647
  %2165 = vmatpush2.bf16.msra.mxu0 %v1646
  %2166 = vmatprep.subr.bf16.mxu0 %v1644
  %2167 = vmatpush2.bf16.msra.mxu0 %v1643
  %2168 = vmatprep.mubr.bf16.mxu0 %v627
  %2169 = vmatmul.mubr.bf16.gmra.mxu0 %v611
  %v2170 = vpop.f32.mrf.mxu0
  %v2171 = vadd.f32 0.0, %v2170
  %v2172 = vpop.f32.mrf.mxu0
  %v2173 = vadd.f32 0.0, %v2172
  %v2174 = vpop.f32.mrf.mxu0
  %v2175 = vadd.f32 0.0, %v2174
  %v2176 = vpop.f32.mrf.mxu0
  %v2177 = vadd.f32 0.0, %v2176
  %2178 = vmatprep.mubr.bf16.mxu0 %v628
  %2179 = vmatmul.mubr.bf16.gmra.mxu0 %v612
  %v2180 = vpop.f32.mrf.mxu0
  %v2181 = vadd.f32 0.0, %v2180
  %v2182 = vpop.f32.mrf.mxu0
  %v2183 = vadd.f32 0.0, %v2182
  %v2184 = vpop.f32.mrf.mxu0
  %v2185 = vadd.f32 0.0, %v2184
  %v2186 = vpop.f32.mrf.mxu0
  %v2187 = vadd.f32 0.0, %v2186
  %2188 = vmatprep.mubr.bf16.mxu0 %v629
  %2189 = vmatmul.mubr.bf16.gmra.mxu0 %v613
  %v2190 = vpop.f32.mrf.mxu0
  %v2191 = vadd.f32 0.0, %v2190
  %v2192 = vpop.f32.mrf.mxu0
  %v2193 = vadd.f32 0.0, %v2192
  %v2194 = vpop.f32.mrf.mxu0
  %v2195 = vadd.f32 0.0, %v2194
  %v2196 = vpop.f32.mrf.mxu0
  %v2197 = vadd.f32 0.0, %v2196
  %2198 = vmatprep.mubr.bf16.mxu0 %v630
  %2199 = vmatmul.mubr.bf16.gmra.mxu0 %v614
  %v2200 = vpop.f32.mrf.mxu0
  %v2201 = vadd.f32 0.0, %v2200
  %v2202 = vpop.f32.mrf.mxu0
  %v2203 = vadd.f32 0.0, %v2202
  %v2204 = vpop.f32.mrf.mxu0
  %v2205 = vpop.f32.mrf.mxu0
  %2206 = vdwg.mxu0
  %2207 = vmatprep.subr.bf16.mxu0 %v1689
  %2208 = vmatpush1.bf16.msra.mxu0 %v1688
  %2209 = vmatprep.subr.bf16.mxu0 %v1686
  %2210 = vmatpush1.bf16.msra.mxu0 %v1685
  %2211 = vmatprep.subr.bf16.mxu0 %v1683
  %2212 = vmatpush1.bf16.msra.mxu0 %v1682
  %2213 = vmatprep.subr.bf16.mxu0 %v1680
  %2214 = vmatpush1.bf16.msra.mxu0 %v1679
  %2215 = vmatprep.subr.bf16.mxu0 %v1677
  %2216 = vmatpush1.bf16.msra.mxu0 %v1676
  %2217 = vmatprep.subr.bf16.mxu0 %v1674
  %2218 = vmatpush1.bf16.msra.mxu0 %v1673
  %2219 = vmatprep.subr.bf16.mxu0 %v1671
  %2220 = vmatpush1.bf16.msra.mxu0 %v1670
  %2221 = vmatprep.subr.bf16.mxu0 %v1668
  %2222 = vmatpush1.bf16.msra.mxu0 %v1667
  %2223 = vmatprep.subr.bf16.mxu0 %v1713
  %2224 = vmatpush2.bf16.msra.mxu0 %v1712
  %2225 = vmatprep.subr.bf16.mxu0 %v1710
  %2226 = vmatpush2.bf16.msra.mxu0 %v1709
  %2227 = vmatprep.subr.bf16.mxu0 %v1707
  %2228 = vmatpush2.bf16.msra.mxu0 %v1706
  %2229 = vmatprep.subr.bf16.mxu0 %v1704
  %2230 = vmatpush2.bf16.msra.mxu0 %v1703
  %2231 = vmatprep.subr.bf16.mxu0 %v1701
  %2232 = vmatpush2.bf16.msra.mxu0 %v1700
  %2233 = vmatprep.subr.bf16.mxu0 %v1698
  %2234 = vmatpush2.bf16.msra.mxu0 %v1697
  %2235 = vmatprep.subr.bf16.mxu0 %v1695
  %2236 = vmatpush2.bf16.msra.mxu0 %v1694
  %2237 = vmatprep.subr.bf16.mxu0 %v1692
  %2238 = vmatpush2.bf16.msra.mxu0 %v1691
  %2239 = vmatprep.mubr.bf16.mxu0 %v659
  %2240 = vmatmul.mubr.bf16.gmra.mxu0 %v643
  %v2241 = vpop.f32.mrf.mxu0
  %v2242 = vadd.f32 %v2171, %v2241
  %v2243 = vpop.f32.mrf.mxu0
  %v2244 = vadd.f32 %v2173, %v2243
  %v2245 = vpop.f32.mrf.mxu0
  %v2246 = vadd.f32 %v2175, %v2245
  %v2247 = vpop.f32.mrf.mxu0
  %v2248 = vadd.f32 %v2177, %v2247
  %2249 = vmatprep.mubr.bf16.mxu0 %v660
  %2250 = vmatmul.mubr.bf16.gmra.mxu0 %v644
  %v2251 = vpop.f32.mrf.mxu0
  %v2252 = vadd.f32 %v2181, %v2251
  %v2253 = vpop.f32.mrf.mxu0
  %v2254 = vadd.f32 %v2183, %v2253
  %v2255 = vpop.f32.mrf.mxu0
  %v2256 = vadd.f32 %v2185, %v2255
  %v2257 = vpop.f32.mrf.mxu0
  %v2258 = vadd.f32 %v2187, %v2257
  %2259 = vmatprep.mubr.bf16.mxu0 %v661
  %2260 = vmatmul.mubr.bf16.gmra.mxu0 %v645
  %v2261 = vpop.f32.mrf.mxu0
  %v2262 = vadd.f32 %v2191, %v2261
  %v2263 = vpop.f32.mrf.mxu0
  %v2264 = vadd.f32 %v2193, %v2263
  %v2265 = vpop.f32.mrf.mxu0
  %v2266 = vadd.f32 %v2195, %v2265
  %v2267 = vpop.f32.mrf.mxu0
  %v2268 = vadd.f32 %v2197, %v2267
  %2269 = vmatprep.mubr.bf16.mxu0 %v662
  %2270 = vmatmul.mubr.bf16.gmra.mxu0 %v646
  %v2271 = vpop.f32.mrf.mxu0
  %v2272 = vadd.f32 %v2201, %v2271
  %v2273 = vpop.f32.mrf.mxu0
  %v2274 = vadd.f32 %v2203, %v2273
  %v2275 = vpop.f32.mrf.mxu0
  %v2276 = vpop.f32.mrf.mxu0
  %2277 = vdwg.mxu0
  %2278 = vmatprep.subr.bf16.mxu0 %v1737
  %2279 = vmatpush1.bf16.msra.mxu0 %v1736
  %2280 = vmatprep.subr.bf16.mxu0 %v1734
  %2281 = vmatpush1.bf16.msra.mxu0 %v1733
  %2282 = vmatprep.subr.bf16.mxu0 %v1731
  %2283 = vmatpush1.bf16.msra.mxu0 %v1730
  %2284 = vmatprep.subr.bf16.mxu0 %v1728
  %2285 = vmatpush1.bf16.msra.mxu0 %v1727
  %2286 = vmatprep.subr.bf16.mxu0 %v1725
  %2287 = vmatpush1.bf16.msra.mxu0 %v1724
  %2288 = vmatprep.subr.bf16.mxu0 %v1722
  %2289 = vmatpush1.bf16.msra.mxu0 %v1721
  %2290 = vmatprep.subr.bf16.mxu0 %v1719
  %2291 = vmatpush1.bf16.msra.mxu0 %v1718
  %2292 = vmatprep.subr.bf16.mxu0 %v1716
  %2293 = vmatpush1.bf16.msra.mxu0 %v1715
  %2294 = vmatprep.subr.bf16.mxu0 %v1761
  %2295 = vmatpush2.bf16.msra.mxu0 %v1760
  %2296 = vmatprep.subr.bf16.mxu0 %v1758
  %2297 = vmatpush2.bf16.msra.mxu0 %v1757
  %2298 = vmatprep.subr.bf16.mxu0 %v1755
  %2299 = vmatpush2.bf16.msra.mxu0 %v1754
  %2300 = vmatprep.subr.bf16.mxu0 %v1752
  %2301 = vmatpush2.bf16.msra.mxu0 %v1751
  %2302 = vmatprep.subr.bf16.mxu0 %v1749
  %2303 = vmatpush2.bf16.msra.mxu0 %v1748
  %2304 = vmatprep.subr.bf16.mxu0 %v1746
  %2305 = vmatpush2.bf16.msra.mxu0 %v1745
  %2306 = vmatprep.subr.bf16.mxu0 %v1743
  %2307 = vmatpush2.bf16.msra.mxu0 %v1742
  %2308 = vmatprep.subr.bf16.mxu0 %v1740
  %2309 = vmatpush2.bf16.msra.mxu0 %v1739
  %2310 = vmatprep.mubr.bf16.mxu0 %v691
  %2311 = vmatmul.mubr.bf16.gmra.mxu0 %v675
  %v2312 = vpop.f32.mrf.mxu0
  %v2313 = vadd.f32 %v2242, %v2312
  %v2314 = vpop.f32.mrf.mxu0
  %v2315 = vadd.f32 %v2244, %v2314
  %v2316 = vpop.f32.mrf.mxu0
  %v2317 = vadd.f32 %v2246, %v2316
  %v2318 = vpop.f32.mrf.mxu0
  %v2319 = vadd.f32 %v2248, %v2318
  %2320 = vmatprep.mubr.bf16.mxu0 %v692
  %2321 = vmatmul.mubr.bf16.gmra.mxu0 %v676
  %v2322 = vpop.f32.mrf.mxu0
  %v2323 = vadd.f32 %v2252, %v2322
  %v2324 = vpop.f32.mrf.mxu0
  %v2325 = vadd.f32 %v2254, %v2324
  %v2326 = vpop.f32.mrf.mxu0
  %v2327 = vadd.f32 %v2256, %v2326
  %v2328 = vpop.f32.mrf.mxu0
  %v2329 = vadd.f32 %v2258, %v2328
  %2330 = vmatprep.mubr.bf16.mxu0 %v693
  %2331 = vmatmul.mubr.bf16.gmra.mxu0 %v677
  %v2332 = vpop.f32.mrf.mxu0
  %v2333 = vadd.f32 %v2262, %v2332
  %v2334 = vpop.f32.mrf.mxu0
  %v2335 = vadd.f32 %v2264, %v2334
  %v2336 = vpop.f32.mrf.mxu0
  %v2337 = vadd.f32 %v2266, %v2336
  %v2338 = vpop.f32.mrf.mxu0
  %v2339 = vadd.f32 %v2268, %v2338
  %2340 = vmatprep.mubr.bf16.mxu0 %v694
  %2341 = vmatmul.mubr.bf16.gmra.mxu0 %v678
  %v2342 = vpop.f32.mrf.mxu0
  %v2343 = vadd.f32 %v2272, %v2342
  %v2344 = vpop.f32.mrf.mxu0
  %v2345 = vadd.f32 %v2274, %v2344
  %v2346 = vpop.f32.mrf.mxu0
  %v2347 = vpop.f32.mrf.mxu0
  %2348 = vdwg.mxu0
  %2349 = vmatprep.subr.bf16.mxu0 %v1785
  %2350 = vmatpush1.bf16.msra.mxu0 %v1784
  %2351 = vmatprep.subr.bf16.mxu0 %v1782
  %2352 = vmatpush1.bf16.msra.mxu0 %v1781
  %2353 = vmatprep.subr.bf16.mxu0 %v1779
  %2354 = vmatpush1.bf16.msra.mxu0 %v1778
  %2355 = vmatprep.subr.bf16.mxu0 %v1776
  %2356 = vmatpush1.bf16.msra.mxu0 %v1775
  %2357 = vmatprep.subr.bf16.mxu0 %v1773
  %2358 = vmatpush1.bf16.msra.mxu0 %v1772
  %2359 = vmatprep.subr.bf16.mxu0 %v1770
  %2360 = vmatpush1.bf16.msra.mxu0 %v1769
  %2361 = vmatprep.subr.bf16.mxu0 %v1767
  %2362 = vmatpush1.bf16.msra.mxu0 %v1766
  %2363 = vmatprep.subr.bf16.mxu0 %v1764
  %2364 = vmatpush1.bf16.msra.mxu0 %v1763
  %2365 = vmatprep.subr.bf16.mxu0 %v1809
  %2366 = vmatpush2.bf16.msra.mxu0 %v1808
  %2367 = vmatprep.subr.bf16.mxu0 %v1806
  %2368 = vmatpush2.bf16.msra.mxu0 %v1805
  %2369 = vmatprep.subr.bf16.mxu0 %v1803
  %2370 = vmatpush2.bf16.msra.mxu0 %v1802
  %2371 = vmatprep.subr.bf16.mxu0 %v1800
  %2372 = vmatpush2.bf16.msra.mxu0 %v1799
  %2373 = vmatprep.subr.bf16.mxu0 %v1797
  %2374 = vmatpush2.bf16.msra.mxu0 %v1796
  %2375 = vmatprep.subr.bf16.mxu0 %v1794
  %2376 = vmatpush2.bf16.msra.mxu0 %v1793
  %2377 = vmatprep.subr.bf16.mxu0 %v1791
  %2378 = vmatpush2.bf16.msra.mxu0 %v1790
  %2379 = vmatprep.subr.bf16.mxu0 %v1788
  %2380 = vmatpush2.bf16.msra.mxu0 %v1787
  %2381 = vmatprep.mubr.bf16.mxu0 %v723
  %2382 = vmatmul.mubr.bf16.gmra.mxu0 %v707
  %v2383 = vpop.f32.mrf.mxu0
  %v2384 = vadd.f32 %v2313, %v2383
  %v2385 = vpop.f32.mrf.mxu0
  %v2386 = vadd.f32 %v2315, %v2385
  %v2387 = vpop.f32.mrf.mxu0
  %v2388 = vadd.f32 %v2317, %v2387
  %v2389 = vpop.f32.mrf.mxu0
  %v2390 = vadd.f32 %v2319, %v2389
  %2391 = vmatprep.mubr.bf16.mxu0 %v724
  %2392 = vmatmul.mubr.bf16.gmra.mxu0 %v708
  %v2393 = vpop.f32.mrf.mxu0
  %v2394 = vadd.f32 %v2323, %v2393
  %v2395 = vpop.f32.mrf.mxu0
  %v2396 = vadd.f32 %v2325, %v2395
  %v2397 = vpop.f32.mrf.mxu0
  %v2398 = vadd.f32 %v2327, %v2397
  %v2399 = vpop.f32.mrf.mxu0
  %v2400 = vadd.f32 %v2329, %v2399
  %2401 = vmatprep.mubr.bf16.mxu0 %v725
  %2402 = vmatmul.mubr.bf16.gmra.mxu0 %v709
  %v2403 = vpop.f32.mrf.mxu0
  %v2404 = vadd.f32 %v2333, %v2403
  %v2405 = vpop.f32.mrf.mxu0
  %v2406 = vadd.f32 %v2335, %v2405
  %v2407 = vpop.f32.mrf.mxu0
  %v2408 = vadd.f32 %v2337, %v2407
  %v2409 = vpop.f32.mrf.mxu0
  %v2410 = vadd.f32 %v2339, %v2409
  %2411 = vmatprep.mubr.bf16.mxu0 %v726
  %2412 = vmatmul.mubr.bf16.gmra.mxu0 %v710
  %v2413 = vpop.f32.mrf.mxu0
  %v2414 = vadd.f32 %v2343, %v2413
  %v2415 = vpop.f32.mrf.mxu0
  %v2416 = vadd.f32 %v2345, %v2415
  %v2417 = vpop.f32.mrf.mxu0
  %v2418 = vpop.f32.mrf.mxu0
  %2419 = vdwg.mxu0
  %2420 = vmatprep.subr.bf16.mxu0 %v1833
  %2421 = vmatpush1.bf16.msra.mxu0 %v1832
  %2422 = vmatprep.subr.bf16.mxu0 %v1830
  %2423 = vmatpush1.bf16.msra.mxu0 %v1829
  %2424 = vmatprep.subr.bf16.mxu0 %v1827
  %2425 = vmatpush1.bf16.msra.mxu0 %v1826
  %2426 = vmatprep.subr.bf16.mxu0 %v1824
  %2427 = vmatpush1.bf16.msra.mxu0 %v1823
  %2428 = vmatprep.subr.bf16.mxu0 %v1821
  %2429 = vmatpush1.bf16.msra.mxu0 %v1820
  %2430 = vmatprep.subr.bf16.mxu0 %v1818
  %2431 = vmatpush1.bf16.msra.mxu0 %v1817
  %2432 = vmatprep.subr.bf16.mxu0 %v1815
  %2433 = vmatpush1.bf16.msra.mxu0 %v1814
  %2434 = vmatprep.subr.bf16.mxu0 %v1812
  %2435 = vmatpush1.bf16.msra.mxu0 %v1811
  %2436 = vmatprep.subr.bf16.mxu0 %v1857
  %2437 = vmatpush2.bf16.msra.mxu0 %v1856
  %2438 = vmatprep.subr.bf16.mxu0 %v1854
  %2439 = vmatpush2.bf16.msra.mxu0 %v1853
  %2440 = vmatprep.subr.bf16.mxu0 %v1851
  %2441 = vmatpush2.bf16.msra.mxu0 %v1850
  %2442 = vmatprep.subr.bf16.mxu0 %v1848
  %2443 = vmatpush2.bf16.msra.mxu0 %v1847
  %2444 = vmatprep.subr.bf16.mxu0 %v1845
  %2445 = vmatpush2.bf16.msra.mxu0 %v1844
  %2446 = vmatprep.subr.bf16.mxu0 %v1842
  %2447 = vmatpush2.bf16.msra.mxu0 %v1841
  %2448 = vmatprep.subr.bf16.mxu0 %v1839
  %2449 = vmatpush2.bf16.msra.mxu0 %v1838
  %2450 = vmatprep.subr.bf16.mxu0 %v1836
  %2451 = vmatpush2.bf16.msra.mxu0 %v1835
  %2452 = vmatprep.mubr.bf16.mxu0 %v755
  %2453 = vmatmul.mubr.bf16.gmra.mxu0 %v739
  %v2454 = vpop.f32.mrf.mxu0
  %v2455 = vadd.f32 %v2384, %v2454
  %v2456 = vpop.f32.mrf.mxu0
  %v2457 = vadd.f32 %v2386, %v2456
  %v2458 = vpop.f32.mrf.mxu0
  %v2459 = vadd.f32 %v2388, %v2458
  %v2460 = vpop.f32.mrf.mxu0
  %v2461 = vadd.f32 %v2390, %v2460
  %2462 = vmatprep.mubr.bf16.mxu0 %v756
  %2463 = vmatmul.mubr.bf16.gmra.mxu0 %v740
  %v2464 = vpop.f32.mrf.mxu0
  %v2465 = vadd.f32 %v2394, %v2464
  %v2466 = vpop.f32.mrf.mxu0
  %v2467 = vadd.f32 %v2396, %v2466
  %v2468 = vpop.f32.mrf.mxu0
  %v2469 = vadd.f32 %v2398, %v2468
  %v2470 = vpop.f32.mrf.mxu0
  %v2471 = vadd.f32 %v2400, %v2470
  %2472 = vmatprep.mubr.bf16.mxu0 %v757
  %2473 = vmatmul.mubr.bf16.gmra.mxu0 %v741
  %v2474 = vpop.f32.mrf.mxu0
  %v2475 = vadd.f32 %v2404, %v2474
  %v2476 = vpop.f32.mrf.mxu0
  %v2477 = vadd.f32 %v2406, %v2476
  %v2478 = vpop.f32.mrf.mxu0
  %v2479 = vadd.f32 %v2408, %v2478
  %v2480 = vpop.f32.mrf.mxu0
  %v2481 = vadd.f32 %v2410, %v2480
  %2482 = vmatprep.mubr.bf16.mxu0 %v758
  %2483 = vmatmul.mubr.bf16.gmra.mxu0 %v742
  %v2484 = vpop.f32.mrf.mxu0
  %v2485 = vadd.f32 %v2414, %v2484
  %v2486 = vpop.f32.mrf.mxu0
  %v2487 = vadd.f32 %v2416, %v2486
  %v2488 = vpop.f32.mrf.mxu0
  %v2489 = vpop.f32.mrf.mxu0
  %2490 = vdwg.mxu0
  %2491 = vmatprep.subr.bf16.mxu0 0
  %2492 = vmatpush1.bf16.msra.mxu0 0
  %2493 = vmatprep.subr.bf16.mxu0 0
  %2494 = vmatpush1.bf16.msra.mxu0 0
  %2495 = vmatprep.subr.bf16.mxu0 0
  %2496 = vmatpush1.bf16.msra.mxu0 0
  %2497 = vmatprep.subr.bf16.mxu0 0
  %2498 = vmatpush1.bf16.msra.mxu0 0
  %2499 = vmatprep.subr.bf16.mxu0 %v1869
  %2500 = vmatpush1.bf16.msra.mxu0 %v1868
  %2501 = vmatprep.subr.bf16.mxu0 %v1866
  %2502 = vmatpush1.bf16.msra.mxu0 %v1865
  %2503 = vmatprep.subr.bf16.mxu0 %v1863
  %2504 = vmatpush1.bf16.msra.mxu0 %v1862
  %2505 = vmatprep.subr.bf16.mxu0 %v1860
  %2506 = vmatpush1.bf16.msra.mxu0 %v1859
  %2507 = vmatprep.subr.bf16.mxu0 0
  %2508 = vmatpush2.bf16.msra.mxu0 0
  %2509 = vmatprep.subr.bf16.mxu0 0
  %2510 = vmatpush2.bf16.msra.mxu0 0
  %2511 = vmatprep.subr.bf16.mxu0 0
  %2512 = vmatpush2.bf16.msra.mxu0 0
  %2513 = vmatprep.subr.bf16.mxu0 0
  %2514 = vmatpush2.bf16.msra.mxu0 0
  %2515 = vmatprep.subr.bf16.mxu0 0
  %2516 = vmatpush2.bf16.msra.mxu0 0
  %2517 = vmatprep.subr.bf16.mxu0 0
  %2518 = vmatpush2.bf16.msra.mxu0 0
  %2519 = vmatprep.subr.bf16.mxu0 0
  %2520 = vmatpush2.bf16.msra.mxu0 0
  %2521 = vmatprep.subr.bf16.mxu0 0
  %2522 = vmatpush2.bf16.msra.mxu0 0
  %2523 = vmatprep.mubr.bf16.mxu0 0
  %2524 = vmatmul.mubr.bf16.gmra.mxu0 %v2125
  %v2525 = vpop.f32.mrf.mxu0
  %v2526 = vadd.f32 %v2455, %v2525
  %v2527 = vpop.f32.mrf.mxu0
  %v2528 = vadd.f32 %v2457, %v2527
  %v2529 = vpop.f32.mrf.mxu0
  %v2530 = vadd.f32 %v2459, %v2529
  %v2531 = vpop.f32.mrf.mxu0
  %v2532 = vadd.f32 %v2461, %v2531
  %2533 = vmatprep.mubr.bf16.mxu0 0
  %2534 = vmatmul.mubr.bf16.gmra.mxu0 %v2128
  %v2535 = vpop.f32.mrf.mxu0
  %v2536 = vadd.f32 %v2465, %v2535
  %v2537 = vpop.f32.mrf.mxu0
  %v2538 = vadd.f32 %v2467, %v2537
  %v2539 = vpop.f32.mrf.mxu0
  %v2540 = vadd.f32 %v2469, %v2539
  %v2541 = vpop.f32.mrf.mxu0
  %v2542 = vadd.f32 %v2471, %v2541
  %2543 = vmatprep.mubr.bf16.mxu0 0
  %2544 = vmatmul.mubr.bf16.gmra.mxu0 %v2131
  %v2545 = vpop.f32.mrf.mxu0
  %v2546 = vadd.f32 %v2475, %v2545
  %v2547 = vpop.f32.mrf.mxu0
  %v2548 = vadd.f32 %v2477, %v2547
  %v2549 = vpop.f32.mrf.mxu0
  %v2550 = vadd.f32 %v2479, %v2549
  %v2551 = vpop.f32.mrf.mxu0
  %v2552 = vadd.f32 %v2481, %v2551
  %2553 = vmatprep.mubr.bf16.mxu0 0
  %2554 = vmatmul.mubr.bf16.gmra.mxu0 %v2134
  %v2555 = vpop.f32.mrf.mxu0
  %v2556 = vadd.f32 %v2485, %v2555
  %v2557 = vpop.f32.mrf.mxu0
  %v2558 = vadd.f32 %v2487, %v2557
  %v2559 = vpop.f32.mrf.mxu0
  %v2560 = vpop.f32.mrf.mxu0
  %2561 = vdwg.mxu0
  %2562 = vmatprep.subr.bf16.mxu0 0
  %2563 = vmatpush1.bf16.msra.mxu0 %v1642
  %2564 = vmatprep.subr.bf16.mxu0 0
  %2565 = vmatpush1.bf16.msra.mxu0 %v1639
  %2566 = vmatprep.subr.bf16.mxu0 0
  %2567 = vmatpush1.bf16.msra.mxu0 %v1636
  %2568 = vmatprep.subr.bf16.mxu0 0
  %2569 = vmatpush1.bf16.msra.mxu0 %v1633
  %2570 = vmatprep.subr.bf16.mxu0 0
  %2571 = vmatpush1.bf16.msra.mxu0 %v1630
  %2572 = vmatprep.subr.bf16.mxu0 0
  %2573 = vmatpush1.bf16.msra.mxu0 %v1627
  %2574 = vmatprep.subr.bf16.mxu0 0
  %2575 = vmatpush1.bf16.msra.mxu0 %v1624
  %2576 = vmatprep.subr.bf16.mxu0 0
  %2577 = vmatpush1.bf16.msra.mxu0 %v1621
  %2578 = vmatprep.subr.bf16.mxu0 0
  %2579 = vmatpush2.bf16.msra.mxu0 %v1666
  %2580 = vmatprep.subr.bf16.mxu0 0
  %2581 = vmatpush2.bf16.msra.mxu0 %v1663
  %2582 = vmatprep.subr.bf16.mxu0 0
  %2583 = vmatpush2.bf16.msra.mxu0 %v1660
  %2584 = vmatprep.subr.bf16.mxu0 0
  %2585 = vmatpush2.bf16.msra.mxu0 %v1657
  %2586 = vmatprep.subr.bf16.mxu0 0
  %2587 = vmatpush2.bf16.msra.mxu0 %v1654
  %2588 = vmatprep.subr.bf16.mxu0 0
  %2589 = vmatpush2.bf16.msra.mxu0 %v1651
  %2590 = vmatprep.subr.bf16.mxu0 0
  %2591 = vmatpush2.bf16.msra.mxu0 %v1648
  %2592 = vmatprep.subr.bf16.mxu0 0
  %2593 = vmatpush2.bf16.msra.mxu0 %v1645
  %2594 = vmatprep.mubr.bf16.mxu0 %v627
  %2595 = vmatmul.mubr.bf16.gmra.mxu0 %v611
  %v2596 = vpop.f32.mrf.mxu0
  %v2597 = vadd.f32 0.0, %v2596
  %v2598 = vpop.f32.mrf.mxu0
  %v2599 = vpop.f32.mrf.mxu0
  %v2600 = vadd.f32 0.0, %v2599
  %v2601 = vpop.f32.mrf.mxu0
  %2602 = vmatprep.mubr.bf16.mxu0 %v628
  %2603 = vmatmul.mubr.bf16.gmra.mxu0 %v612
  %v2604 = vpop.f32.mrf.mxu0
  %v2605 = vadd.f32 0.0, %v2604
  %v2606 = vpop.f32.mrf.mxu0
  %v2607 = vpop.f32.mrf.mxu0
  %v2608 = vadd.f32 0.0, %v2607
  %v2609 = vpop.f32.mrf.mxu0
  %2610 = vmatprep.mubr.bf16.mxu0 %v629
  %2611 = vmatmul.mubr.bf16.gmra.mxu0 %v613
  %v2612 = vpop.f32.mrf.mxu0
  %v2613 = vadd.f32 0.0, %v2612
  %v2614 = vpop.f32.mrf.mxu0
  %v2615 = vpop.f32.mrf.mxu0
  %v2616 = vadd.f32 0.0, %v2615
  %v2617 = vpop.f32.mrf.mxu0
  %2618 = vmatprep.mubr.bf16.mxu0 %v630
  %2619 = vmatmul.mubr.bf16.gmra.mxu0 %v614
  %v2620 = vpop.f32.mrf.mxu0
  %v2621 = vadd.f32 0.0, %v2620
  %v2622 = vpop.f32.mrf.mxu0
  %v2623 = vpop.f32.mrf.mxu0
  %v2624 = vpop.f32.mrf.mxu0
  %2625 = vdwg.mxu0
  %2626 = vmatprep.subr.bf16.mxu0 0
  %2627 = vmatpush1.bf16.msra.mxu0 %v1690
  %2628 = vmatprep.subr.bf16.mxu0 0
  %2629 = vmatpush1.bf16.msra.mxu0 %v1687
  %2630 = vmatprep.subr.bf16.mxu0 0
  %2631 = vmatpush1.bf16.msra.mxu0 %v1684
  %2632 = vmatprep.subr.bf16.mxu0 0
  %2633 = vmatpush1.bf16.msra.mxu0 %v1681
  %2634 = vmatprep.subr.bf16.mxu0 0
  %2635 = vmatpush1.bf16.msra.mxu0 %v1678
  %2636 = vmatprep.subr.bf16.mxu0 0
  %2637 = vmatpush1.bf16.msra.mxu0 %v1675
  %2638 = vmatprep.subr.bf16.mxu0 0
  %2639 = vmatpush1.bf16.msra.mxu0 %v1672
  %2640 = vmatprep.subr.bf16.mxu0 0
  %2641 = vmatpush1.bf16.msra.mxu0 %v1669
  %2642 = vmatprep.subr.bf16.mxu0 0
  %2643 = vmatpush2.bf16.msra.mxu0 %v1714
  %2644 = vmatprep.subr.bf16.mxu0 0
  %2645 = vmatpush2.bf16.msra.mxu0 %v1711
  %2646 = vmatprep.subr.bf16.mxu0 0
  %2647 = vmatpush2.bf16.msra.mxu0 %v1708
  %2648 = vmatprep.subr.bf16.mxu0 0
  %2649 = vmatpush2.bf16.msra.mxu0 %v1705
  %2650 = vmatprep.subr.bf16.mxu0 0
  %2651 = vmatpush2.bf16.msra.mxu0 %v1702
  %2652 = vmatprep.subr.bf16.mxu0 0
  %2653 = vmatpush2.bf16.msra.mxu0 %v1699
  %2654 = vmatprep.subr.bf16.mxu0 0
  %2655 = vmatpush2.bf16.msra.mxu0 %v1696
  %2656 = vmatprep.subr.bf16.mxu0 0
  %2657 = vmatpush2.bf16.msra.mxu0 %v1693
  %2658 = vmatprep.mubr.bf16.mxu0 %v659
  %2659 = vmatmul.mubr.bf16.gmra.mxu0 %v643
  %v2660 = vpop.f32.mrf.mxu0
  %v2661 = vadd.f32 %v2597, %v2660
  %v2662 = vpop.f32.mrf.mxu0
  %v2663 = vpop.f32.mrf.mxu0
  %v2664 = vadd.f32 %v2600, %v2663
  %v2665 = vpop.f32.mrf.mxu0
  %2666 = vmatprep.mubr.bf16.mxu0 %v660
  %2667 = vmatmul.mubr.bf16.gmra.mxu0 %v644
  %v2668 = vpop.f32.mrf.mxu0
  %v2669 = vadd.f32 %v2605, %v2668
  %v2670 = vpop.f32.mrf.mxu0
  %v2671 = vpop.f32.mrf.mxu0
  %v2672 = vadd.f32 %v2608, %v2671
  %v2673 = vpop.f32.mrf.mxu0
  %2674 = vmatprep.mubr.bf16.mxu0 %v661
  %2675 = vmatmul.mubr.bf16.gmra.mxu0 %v645
  %v2676 = vpop.f32.mrf.mxu0
  %v2677 = vadd.f32 %v2613, %v2676
  %v2678 = vpop.f32.mrf.mxu0
  %v2679 = vpop.f32.mrf.mxu0
  %v2680 = vadd.f32 %v2616, %v2679
  %v2681 = vpop.f32.mrf.mxu0
  %2682 = vmatprep.mubr.bf16.mxu0 %v662
  %2683 = vmatmul.mubr.bf16.gmra.mxu0 %v646
  %v2684 = vpop.f32.mrf.mxu0
  %v2685 = vadd.f32 %v2621, %v2684
  %v2686 = vpop.f32.mrf.mxu0
  %v2687 = vpop.f32.mrf.mxu0
  %v2688 = vpop.f32.mrf.mxu0
  %2689 = vdwg.mxu0
  %2690 = vmatprep.subr.bf16.mxu0 0
  %2691 = vmatpush1.bf16.msra.mxu0 %v1738
  %2692 = vmatprep.subr.bf16.mxu0 0
  %2693 = vmatpush1.bf16.msra.mxu0 %v1735
  %2694 = vmatprep.subr.bf16.mxu0 0
  %2695 = vmatpush1.bf16.msra.mxu0 %v1732
  %2696 = vmatprep.subr.bf16.mxu0 0
  %2697 = vmatpush1.bf16.msra.mxu0 %v1729
  %2698 = vmatprep.subr.bf16.mxu0 0
  %2699 = vmatpush1.bf16.msra.mxu0 %v1726
  %2700 = vmatprep.subr.bf16.mxu0 0
  %2701 = vmatpush1.bf16.msra.mxu0 %v1723
  %2702 = vmatprep.subr.bf16.mxu0 0
  %2703 = vmatpush1.bf16.msra.mxu0 %v1720
  %2704 = vmatprep.subr.bf16.mxu0 0
  %2705 = vmatpush1.bf16.msra.mxu0 %v1717
  %2706 = vmatprep.subr.bf16.mxu0 0
  %2707 = vmatpush2.bf16.msra.mxu0 %v1762
  %2708 = vmatprep.subr.bf16.mxu0 0
  %2709 = vmatpush2.bf16.msra.mxu0 %v1759
  %2710 = vmatprep.subr.bf16.mxu0 0
  %2711 = vmatpush2.bf16.msra.mxu0 %v1756
  %2712 = vmatprep.subr.bf16.mxu0 0
  %2713 = vmatpush2.bf16.msra.mxu0 %v1753
  %2714 = vmatprep.subr.bf16.mxu0 0
  %2715 = vmatpush2.bf16.msra.mxu0 %v1750
  %2716 = vmatprep.subr.bf16.mxu0 0
  %2717 = vmatpush2.bf16.msra.mxu0 %v1747
  %2718 = vmatprep.subr.bf16.mxu0 0
  %2719 = vmatpush2.bf16.msra.mxu0 %v1744
  %2720 = vmatprep.subr.bf16.mxu0 0
  %2721 = vmatpush2.bf16.msra.mxu0 %v1741
  %2722 = vmatprep.mubr.bf16.mxu0 %v691
  %2723 = vmatmul.mubr.bf16.gmra.mxu0 %v675
  %v2724 = vpop.f32.mrf.mxu0
  %v2725 = vadd.f32 %v2661, %v2724
  %v2726 = vpop.f32.mrf.mxu0
  %v2727 = vpop.f32.mrf.mxu0
  %v2728 = vadd.f32 %v2664, %v2727
  %v2729 = vpop.f32.mrf.mxu0
  %2730 = vmatprep.mubr.bf16.mxu0 %v692
  %2731 = vmatmul.mubr.bf16.gmra.mxu0 %v676
  %v2732 = vpop.f32.mrf.mxu0
  %v2733 = vadd.f32 %v2669, %v2732
  %v2734 = vpop.f32.mrf.mxu0
  %v2735 = vpop.f32.mrf.mxu0
  %v2736 = vadd.f32 %v2672, %v2735
  %v2737 = vpop.f32.mrf.mxu0
  %2738 = vmatprep.mubr.bf16.mxu0 %v693
  %2739 = vmatmul.mubr.bf16.gmra.mxu0 %v677
  %v2740 = vpop.f32.mrf.mxu0
  %v2741 = vadd.f32 %v2677, %v2740
  %v2742 = vpop.f32.mrf.mxu0
  %v2743 = vpop.f32.mrf.mxu0
  %v2744 = vadd.f32 %v2680, %v2743
  %v2745 = vpop.f32.mrf.mxu0
  %2746 = vmatprep.mubr.bf16.mxu0 %v694
  %2747 = vmatmul.mubr.bf16.gmra.mxu0 %v678
  %v2748 = vpop.f32.mrf.mxu0
  %v2749 = vadd.f32 %v2685, %v2748
  %v2750 = vpop.f32.mrf.mxu0
  %v2751 = vpop.f32.mrf.mxu0
  %v2752 = vpop.f32.mrf.mxu0
  %2753 = vdwg.mxu0
  %2754 = vmatprep.subr.bf16.mxu0 0
  %2755 = vmatpush1.bf16.msra.mxu0 %v1786
  %2756 = vmatprep.subr.bf16.mxu0 0
  %2757 = vmatpush1.bf16.msra.mxu0 %v1783
  %2758 = vmatprep.subr.bf16.mxu0 0
  %2759 = vmatpush1.bf16.msra.mxu0 %v1780
  %2760 = vmatprep.subr.bf16.mxu0 0
  %2761 = vmatpush1.bf16.msra.mxu0 %v1777
  %2762 = vmatprep.subr.bf16.mxu0 0
  %2763 = vmatpush1.bf16.msra.mxu0 %v1774
  %2764 = vmatprep.subr.bf16.mxu0 0
  %2765 = vmatpush1.bf16.msra.mxu0 %v1771
  %2766 = vmatprep.subr.bf16.mxu0 0
  %2767 = vmatpush1.bf16.msra.mxu0 %v1768
  %2768 = vmatprep.subr.bf16.mxu0 0
  %2769 = vmatpush1.bf16.msra.mxu0 %v1765
  %2770 = vmatprep.subr.bf16.mxu0 0
  %2771 = vmatpush2.bf16.msra.mxu0 %v1810
  %2772 = vmatprep.subr.bf16.mxu0 0
  %2773 = vmatpush2.bf16.msra.mxu0 %v1807
  %2774 = vmatprep.subr.bf16.mxu0 0
  %2775 = vmatpush2.bf16.msra.mxu0 %v1804
  %2776 = vmatprep.subr.bf16.mxu0 0
  %2777 = vmatpush2.bf16.msra.mxu0 %v1801
  %2778 = vmatprep.subr.bf16.mxu0 0
  %2779 = vmatpush2.bf16.msra.mxu0 %v1798
  %2780 = vmatprep.subr.bf16.mxu0 0
  %2781 = vmatpush2.bf16.msra.mxu0 %v1795
  %2782 = vmatprep.subr.bf16.mxu0 0
  %2783 = vmatpush2.bf16.msra.mxu0 %v1792
  %2784 = vmatprep.subr.bf16.mxu0 0
  %2785 = vmatpush2.bf16.msra.mxu0 %v1789
  %2786 = vmatprep.mubr.bf16.mxu0 %v723
  %2787 = vmatmul.mubr.bf16.gmra.mxu0 %v707
  %v2788 = vpop.f32.mrf.mxu0
  %v2789 = vadd.f32 %v2725, %v2788
  %v2790 = vpop.f32.mrf.mxu0
  %v2791 = vpop.f32.mrf.mxu0
  %v2792 = vadd.f32 %v2728, %v2791
  %v2793 = vpop.f32.mrf.mxu0
  %2794 = vmatprep.mubr.bf16.mxu0 %v724
  %2795 = vmatmul.mubr.bf16.gmra.mxu0 %v708
  %v2796 = vpop.f32.mrf.mxu0
  %v2797 = vadd.f32 %v2733, %v2796
  %v2798 = vpop.f32.mrf.mxu0
  %v2799 = vpop.f32.mrf.mxu0
  %v2800 = vadd.f32 %v2736, %v2799
  %v2801 = vpop.f32.mrf.mxu0
  %2802 = vmatprep.mubr.bf16.mxu0 %v725
  %2803 = vmatmul.mubr.bf16.gmra.mxu0 %v709
  %v2804 = vpop.f32.mrf.mxu0
  %v2805 = vadd.f32 %v2741, %v2804
  %v2806 = vpop.f32.mrf.mxu0
  %v2807 = vpop.f32.mrf.mxu0
  %v2808 = vadd.f32 %v2744, %v2807
  %v2809 = vpop.f32.mrf.mxu0
  %2810 = vmatprep.mubr.bf16.mxu0 %v726
  %2811 = vmatmul.mubr.bf16.gmra.mxu0 %v710
  %v2812 = vpop.f32.mrf.mxu0
  %v2813 = vadd.f32 %v2749, %v2812
  %v2814 = vpop.f32.mrf.mxu0
  %v2815 = vpop.f32.mrf.mxu0
  %v2816 = vpop.f32.mrf.mxu0
  %2817 = vdwg.mxu0
  %2818 = vmatprep.subr.bf16.mxu0 0
  %2819 = vmatpush1.bf16.msra.mxu0 %v1834
  %2820 = vmatprep.subr.bf16.mxu0 0
  %2821 = vmatpush1.bf16.msra.mxu0 %v1831
  %2822 = vmatprep.subr.bf16.mxu0 0
  %2823 = vmatpush1.bf16.msra.mxu0 %v1828
  %2824 = vmatprep.subr.bf16.mxu0 0
  %2825 = vmatpush1.bf16.msra.mxu0 %v1825
  %2826 = vmatprep.subr.bf16.mxu0 0
  %2827 = vmatpush1.bf16.msra.mxu0 %v1822
  %2828 = vmatprep.subr.bf16.mxu0 0
  %2829 = vmatpush1.bf16.msra.mxu0 %v1819
  %2830 = vmatprep.subr.bf16.mxu0 0
  %2831 = vmatpush1.bf16.msra.mxu0 %v1816
  %2832 = vmatprep.subr.bf16.mxu0 0
  %2833 = vmatpush1.bf16.msra.mxu0 %v1813
  %2834 = vmatprep.subr.bf16.mxu0 0
  %2835 = vmatpush2.bf16.msra.mxu0 %v1858
  %2836 = vmatprep.subr.bf16.mxu0 0
  %2837 = vmatpush2.bf16.msra.mxu0 %v1855
  %2838 = vmatprep.subr.bf16.mxu0 0
  %2839 = vmatpush2.bf16.msra.mxu0 %v1852
  %2840 = vmatprep.subr.bf16.mxu0 0
  %2841 = vmatpush2.bf16.msra.mxu0 %v1849
  %2842 = vmatprep.subr.bf16.mxu0 0
  %2843 = vmatpush2.bf16.msra.mxu0 %v1846
  %2844 = vmatprep.subr.bf16.mxu0 0
  %2845 = vmatpush2.bf16.msra.mxu0 %v1843
  %2846 = vmatprep.subr.bf16.mxu0 0
  %2847 = vmatpush2.bf16.msra.mxu0 %v1840
  %2848 = vmatprep.subr.bf16.mxu0 0
  %2849 = vmatpush2.bf16.msra.mxu0 %v1837
  %2850 = vmatprep.mubr.bf16.mxu0 %v755
  %2851 = vmatmul.mubr.bf16.gmra.mxu0 %v739
  %v2852 = vpop.f32.mrf.mxu0
  %v2853 = vadd.f32 %v2789, %v2852
  %v2854 = vpop.f32.mrf.mxu0
  %v2855 = vpop.f32.mrf.mxu0
  %v2856 = vadd.f32 %v2792, %v2855
  %v2857 = vpop.f32.mrf.mxu0
  %2858 = vmatprep.mubr.bf16.mxu0 %v756
  %2859 = vmatmul.mubr.bf16.gmra.mxu0 %v740
  %v2860 = vpop.f32.mrf.mxu0
  %v2861 = vadd.f32 %v2797, %v2860
  %v2862 = vpop.f32.mrf.mxu0
  %v2863 = vpop.f32.mrf.mxu0
  %v2864 = vadd.f32 %v2800, %v2863
  %v2865 = vpop.f32.mrf.mxu0
  %2866 = vmatprep.mubr.bf16.mxu0 %v757
  %2867 = vmatmul.mubr.bf16.gmra.mxu0 %v741
  %v2868 = vpop.f32.mrf.mxu0
  %v2869 = vadd.f32 %v2805, %v2868
  %v2870 = vpop.f32.mrf.mxu0
  %v2871 = vpop.f32.mrf.mxu0
  %v2872 = vadd.f32 %v2808, %v2871
  %v2873 = vpop.f32.mrf.mxu0
  %2874 = vmatprep.mubr.bf16.mxu0 %v758
  %2875 = vmatmul.mubr.bf16.gmra.mxu0 %v742
  %v2876 = vpop.f32.mrf.mxu0
  %v2877 = vadd.f32 %v2813, %v2876
  %v2878 = vpop.f32.mrf.mxu0
  %v2879 = vpop.f32.mrf.mxu0
  %v2880 = vpop.f32.mrf.mxu0
  %2881 = vdwg.mxu0
  %2882 = vmatprep.subr.bf16.mxu0 0
  %2883 = vmatpush1.bf16.msra.mxu0 0
  %2884 = vmatprep.subr.bf16.mxu0 0
  %2885 = vmatpush1.bf16.msra.mxu0 0
  %2886 = vmatprep.subr.bf16.mxu0 0
  %2887 = vmatpush1.bf16.msra.mxu0 0
  %2888 = vmatprep.subr.bf16.mxu0 0
  %2889 = vmatpush1.bf16.msra.mxu0 0
  %2890 = vmatprep.subr.bf16.mxu0 0
  %2891 = vmatpush1.bf16.msra.mxu0 %v1870
  %2892 = vmatprep.subr.bf16.mxu0 0
  %2893 = vmatpush1.bf16.msra.mxu0 %v1867
  %2894 = vmatprep.subr.bf16.mxu0 0
  %2895 = vmatpush1.bf16.msra.mxu0 %v1864
  %2896 = vmatprep.subr.bf16.mxu0 0
  %2897 = vmatpush1.bf16.msra.mxu0 %v1861
  %2898 = vmatprep.subr.bf16.mxu0 0
  %2899 = vmatpush2.bf16.msra.mxu0 0
  %2900 = vmatprep.subr.bf16.mxu0 0
  %2901 = vmatpush2.bf16.msra.mxu0 0
  %2902 = vmatprep.subr.bf16.mxu0 0
  %2903 = vmatpush2.bf16.msra.mxu0 0
  %2904 = vmatprep.subr.bf16.mxu0 0
  %2905 = vmatpush2.bf16.msra.mxu0 0
  %2906 = vmatprep.subr.bf16.mxu0 0
  %2907 = vmatpush2.bf16.msra.mxu0 0
  %2908 = vmatprep.subr.bf16.mxu0 0
  %2909 = vmatpush2.bf16.msra.mxu0 0
  %2910 = vmatprep.subr.bf16.mxu0 0
  %2911 = vmatpush2.bf16.msra.mxu0 0
  %2912 = vmatprep.subr.bf16.mxu0 0
  %2913 = vmatpush2.bf16.msra.mxu0 0
  %2914 = vmatprep.mubr.bf16.mxu0 0
  %2915 = vmatmul.mubr.bf16.gmra.mxu0 %v2125
  %v2916 = vpop.f32.mrf.mxu0
  %v2917 = vadd.f32 %v2853, %v2916
  %v2918 = vpop.f32.mrf.mxu0
  %v2919 = vpop.f32.mrf.mxu0
  %v2920 = vadd.f32 %v2856, %v2919
  %v2921 = vpop.f32.mrf.mxu0
  %2922 = vmatprep.mubr.bf16.mxu0 0
  %2923 = vmatmul.mubr.bf16.gmra.mxu0 %v2128
  %v2924 = vpop.f32.mrf.mxu0
  %v2925 = vadd.f32 %v2861, %v2924
  %v2926 = vpop.f32.mrf.mxu0
  %v2927 = vpop.f32.mrf.mxu0
  %v2928 = vadd.f32 %v2864, %v2927
  %v2929 = vpop.f32.mrf.mxu0
  %2930 = vmatprep.mubr.bf16.mxu0 0
  %2931 = vmatmul.mubr.bf16.gmra.mxu0 %v2131
  %v2932 = vpop.f32.mrf.mxu0
  %v2933 = vadd.f32 %v2869, %v2932
  %v2934 = vpop.f32.mrf.mxu0
  %v2935 = vpop.f32.mrf.mxu0
  %v2936 = vadd.f32 %v2872, %v2935
  %v2937 = vpop.f32.mrf.mxu0
  %2938 = vmatprep.mubr.bf16.mxu0 0
  %2939 = vmatmul.mubr.bf16.gmra.mxu0 %v2134
  %v2940 = vpop.f32.mrf.mxu0
  %v2941 = vadd.f32 %v2877, %v2940
  %v2942 = vpop.f32.mrf.mxu0
  %v2943 = vpop.f32.mrf.mxu0
  %v2944 = vpop.f32.mrf.mxu0
  %2945 = vdwg.mxu0
  %v2946 = vadd.f32 %v2526, %v2530
  %v2947 = vadd.f32 %v2946, %v2536
  %v2948 = vadd.f32 %v2947, %v2540
  %v2949 = vadd.f32 %v2948, %v2546
  %v2950 = vadd.f32 %v2949, %v2550
  %vm2951 = vcmask 1040384
  %v2952 = vsel %vm2951, %v2556, 0.0
  %v2953 = vadd.f32 %v2950, %v2952
  %v2954 = vrot.slane %v2953, 4
  %v2955 = vadd.f32 %v2953, %v2954
  %v2956 = vrot.slane %v2955, 2
  %v2957 = vadd.f32 %v2955, %v2956
  %v2958 = vrot.slane %v2957, 1
  %v2959 = vadd.f32 %v2957, %v2958
  %v2960 = vadd.f32 %v2528, %v2532
  %v2961 = vadd.f32 %v2960, %v2538
  %v2962 = vadd.f32 %v2961, %v2542
  %v2963 = vadd.f32 %v2962, %v2548
  %v2964 = vadd.f32 %v2963, %v2552
  %v2965 = vsel %vm2951, %v2558, 0.0
  %v2966 = vadd.f32 %v2964, %v2965
  %v2967 = vrot.slane %v2966, 4
  %v2968 = vadd.f32 %v2966, %v2967
  %v2969 = vrot.slane %v2968, 2
  %v2970 = vadd.f32 %v2968, %v2969
  %v2971 = vrot.slane %v2970, 1
  %v2972 = vadd.f32 %v2970, %v2971
  %v2973 = vadd.f32 %v2917, %v2920
  %v2974 = vadd.f32 %v2973, %v2925
  %v2975 = vadd.f32 %v2974, %v2928
  %v2976 = vadd.f32 %v2975, %v2933
  %v2977 = vadd.f32 %v2976, %v2936
  %v2978 = vsel %vm2951, %v2941, 0.0
  %v2979 = vadd.f32 %v2977, %v2978
  %v2980 = vrot.slane %v2979, 4
  %v2981 = vadd.f32 %v2979, %v2980
  %v2982 = vrot.slane %v2981, 2
  %v2983 = vadd.f32 %v2981, %v2982
  %v2984 = vrot.slane %v2983, 1
  %v2985 = vadd.f32 %v2983, %v2984
  %v2986 = vmul.f32 %v2959, 0.020408163
  %v2987 = vmul.f32 %v2972, 0.020408163
  %v2988 = vmul.f32 %v2985, 0.020408163
  %v2989 = vsub.f32 %v2526, %v2986
  %v2990 = vsub.f32 %v2528, %v2987
  %v2991 = vsub.f32 %v2917, %v2988
  %v2992 = vsub.f32 %v2530, %v2986
  %v2993 = vsub.f32 %v2532, %v2987
  %v2994 = vsub.f32 %v2920, %v2988
  %v2995 = vsub.f32 %v2536, %v2986
  %v2996 = vsub.f32 %v2538, %v2987
  %v2997 = vsub.f32 %v2925, %v2988
  %v2998 = vsub.f32 %v2540, %v2986
  %v2999 = vsub.f32 %v2542, %v2987
  %v3000 = vsub.f32 %v2928, %v2988
  %v3001 = vsub.f32 %v2546, %v2986
  %v3002 = vsub.f32 %v2548, %v2987
  %v3003 = vsub.f32 %v2933, %v2988
  %v3004 = vsub.f32 %v2550, %v2986
  %v3005 = vsub.f32 %v2552, %v2987
  %v3006 = vsub.f32 %v2936, %v2988
  %v3007 = vsub.f32 %v2556, %v2986
  %v3008 = vsub.f32 %v2558, %v2987
  %v3009 = vsub.f32 %v2941, %v2988
  %v3010 = vmul.f32 %v2989, %v2989
  %v3011 = vmul.f32 %v2990, %v2990
  %v3012 = vmul.f32 %v2991, %v2991
  %v3013 = vmul.f32 %v2992, %v2992
  %v3014 = vmul.f32 %v2993, %v2993
  %v3015 = vmul.f32 %v2994, %v2994
  %v3016 = vmul.f32 %v2995, %v2995
  %v3017 = vmul.f32 %v2996, %v2996
  %v3018 = vmul.f32 %v2997, %v2997
  %v3019 = vmul.f32 %v2998, %v2998
  %v3020 = vmul.f32 %v2999, %v2999
  %v3021 = vmul.f32 %v3000, %v3000
  %v3022 = vmul.f32 %v3001, %v3001
  %v3023 = vmul.f32 %v3002, %v3002
  %v3024 = vmul.f32 %v3003, %v3003
  %v3025 = vmul.f32 %v3004, %v3004
  %v3026 = vmul.f32 %v3005, %v3005
  %v3027 = vmul.f32 %v3006, %v3006
  %v3028 = vmul.f32 %v3007, %v3007
  %v3029 = vmul.f32 %v3008, %v3008
  %v3030 = vmul.f32 %v3009, %v3009
  %v3031 = vadd.f32 %v3010, %v3013
  %v3032 = vadd.f32 %v3031, %v3016
  %v3033 = vadd.f32 %v3032, %v3019
  %v3034 = vadd.f32 %v3033, %v3022
  %v3035 = vadd.f32 %v3034, %v3025
  %v3036 = vsel %vm2951, %v3028, 0.0
  %v3037 = vadd.f32 %v3035, %v3036
  %v3038 = vrot.slane %v3037, 4
  %v3039 = vadd.f32 %v3037, %v3038
  %v3040 = vrot.slane %v3039, 2
  %v3041 = vadd.f32 %v3039, %v3040
  %v3042 = vrot.slane %v3041, 1
  %v3043 = vadd.f32 %v3041, %v3042
  %v3044 = vadd.f32 %v3011, %v3014
  %v3045 = vadd.f32 %v3044, %v3017
  %v3046 = vadd.f32 %v3045, %v3020
  %v3047 = vadd.f32 %v3046, %v3023
  %v3048 = vadd.f32 %v3047, %v3026
  %v3049 = vsel %vm2951, %v3029, 0.0
  %v3050 = vadd.f32 %v3048, %v3049
  %v3051 = vrot.slane %v3050, 4
  %v3052 = vadd.f32 %v3050, %v3051
  %v3053 = vrot.slane %v3052, 2
  %v3054 = vadd.f32 %v3052, %v3053
  %v3055 = vrot.slane %v3054, 1
  %v3056 = vadd.f32 %v3054, %v3055
  %v3057 = vadd.f32 %v3012, %v3015
  %v3058 = vadd.f32 %v3057, %v3018
  %v3059 = vadd.f32 %v3058, %v3021
  %v3060 = vadd.f32 %v3059, %v3024
  %v3061 = vadd.f32 %v3060, %v3027
  %v3062 = vsel %vm2951, %v3030, 0.0
  %v3063 = vadd.f32 %v3061, %v3062
  %v3064 = vrot.slane %v3063, 4
  %v3065 = vadd.f32 %v3063, %v3064
  %v3066 = vrot.slane %v3065, 2
  %v3067 = vadd.f32 %v3065, %v3066
  %v3068 = vrot.slane %v3067, 1
  %v3069 = vadd.f32 %v3067, %v3068
  %v3070 = vmul.f32 %v3043, 0.020408163
  %v3071 = vmul.f32 %v3056, 0.020408163
  %v3072 = vmul.f32 %v3069, 0.020408163
  %v3073 = vadd.f32 %v3070, 0.001
  %v3074 = vadd.f32 %v3071, 0.001
  %v3075 = vadd.f32 %v3072, 0.001
  %v3076 = vrsqrt.pop %v3073
  %v3077 = vrsqrt.pop %v3074
  %v3078 = vrsqrt.pop %v3075
  %v3079 = vld [vmem:[%s2] ss:$2 sm:$0x7]
  %s3080 = scalar_lea.vmem %s2, 1
  %v3081 = vld [vmem:[%s3080] ss:$2 sm:$0x7]
  %v3085 = vcombine.low %v3076, %v3077
  %v3087 = vunpack.c.l.s4 1966171168
  %v3088 = vunpack.c.0.s8 %v3087
  %v3089 = vlaneseq
  %v3090 = vshrl.u32 %v3089, 7
  %v3091 = vsub.s32 %v3088, %v3090
  %v3092 = vrot.slane %v3085, %v3091
  %v3094 = vunpack.c.l.s4 1966171168
  %v3095 = vunpack.c.0.s8 %v3094
  %v3096 = vlaneseq
  %v3097 = vshrl.u32 %v3096, 7
  %v3098 = vsub.s32 %v3095, %v3097
  %v3099 = vrot.slane %v3078, %v3098
  %v3100 = vcombine.low %v3092, %v3099
  %v3102 = vunpack.c.l.s4 1966171168
  %v3103 = vunpack.c.0.s8 %v3102
  %v3104 = vlaneseq
  %v3105 = vshrl.u32 %v3104, 7
  %v3106 = vsub.s32 %v3103, %v3105
  %v3107 = vrot.slane %v3100, %v3106
  %v3109 = vmul.f32 %v3079, %v3107
  %v3111 = vlaneseq
  %v3112 = vshrl.u32 %v3111, 7
  %v3113 = vsub.s32 0, %v3112
  %v3114 = vrot.slane %v3109, %v3113
  %v3115 = vlaneseq
  %v3116 = vshrl.u32 %v3115, 7
  %v3117 = vsub.s32 1, %v3116
  %v3118 = vrot.slane %v3109, %v3117
  %v3119 = vlaneseq
  %v3120 = vshrl.u32 %v3119, 7
  %v3121 = vsub.s32 2, %v3120
  %v3122 = vrot.slane %v3109, %v3121
  %v3126 = vmul.f32 %v2989, %v3114
  %v3127 = vmul.f32 %v2990, %v3118
  %v3128 = vmul.f32 %v2991, %v3122
  %v3129 = vmul.f32 %v2992, %v3114
  %v3130 = vmul.f32 %v2993, %v3118
  %v3131 = vmul.f32 %v2994, %v3122
  %v3132 = vmul.f32 %v2995, %v3114
  %v3133 = vmul.f32 %v2996, %v3118
  %v3134 = vmul.f32 %v2997, %v3122
  %v3135 = vmul.f32 %v2998, %v3114
  %v3136 = vmul.f32 %v2999, %v3118
  %v3137 = vmul.f32 %v3000, %v3122
  %v3138 = vmul.f32 %v3001, %v3114
  %v3139 = vmul.f32 %v3002, %v3118
  %v3140 = vmul.f32 %v3003, %v3122
  %v3141 = vmul.f32 %v3004, %v3114
  %v3142 = vmul.f32 %v3005, %v3118
  %v3143 = vmul.f32 %v3006, %v3122
  %v3144 = vmul.f32 %v3007, %v3114
  %v3145 = vmul.f32 %v3008, %v3118
  %v3146 = vmul.f32 %v3009, %v3122
  %v3148 = vlaneseq
  %v3149 = vshrl.u32 %v3148, 7
  %v3150 = vsub.s32 0, %v3149
  %v3151 = vrot.slane %v3081, %v3150
  %v3152 = vlaneseq
  %v3153 = vshrl.u32 %v3152, 7
  %v3154 = vsub.s32 1, %v3153
  %v3155 = vrot.slane %v3081, %v3154
  %v3156 = vlaneseq
  %v3157 = vshrl.u32 %v3156, 7
  %v3158 = vsub.s32 2, %v3157
  %v3159 = vrot.slane %v3081, %v3158
  %v3163 = vadd.f32 %v3126, %v3151
  %v3164 = vadd.f32 %v3127, %v3155
  %v3165 = vadd.f32 %v3128, %v3159
  %v3166 = vadd.f32 %v3129, %v3151
  %v3167 = vadd.f32 %v3130, %v3155
  %v3168 = vadd.f32 %v3131, %v3159
  %v3169 = vadd.f32 %v3132, %v3151
  %v3170 = vadd.f32 %v3133, %v3155
  %v3171 = vadd.f32 %v3134, %v3159
  %v3172 = vadd.f32 %v3135, %v3151
  %v3173 = vadd.f32 %v3136, %v3155
  %v3174 = vadd.f32 %v3137, %v3159
  %v3175 = vadd.f32 %v3138, %v3151
  %v3176 = vadd.f32 %v3139, %v3155
  %v3177 = vadd.f32 %v3140, %v3159
  %v3178 = vadd.f32 %v3141, %v3151
  %v3179 = vadd.f32 %v3142, %v3155
  %v3180 = vadd.f32 %v3143, %v3159
  %v3181 = vadd.f32 %v3144, %v3151
  %v3182 = vadd.f32 %v3145, %v3155
  %v3183 = vadd.f32 %v3146, %v3159
  %3184 = vst [vmem:[%s3] sm:$0xff] %v3163
  %3185 = vst [vmem:[%s3 + $0x8] sm:$0xff] %v3164
  %3186 = vst [vmem:[%s3 + $0x10] sm:$0xff] %v3165
  %3187 = vst [vmem:[%s3 + $0x18] sm:$0xff] %v3166
  %3188 = vst [vmem:[%s3 + $0x20] sm:$0xff] %v3167
  %3189 = vst [vmem:[%s3 + $0x28] sm:$0xff] %v3168
  %3190 = vst [vmem:[%s3 + $0x30] sm:$0xff] %v3169
  %3191 = vst [vmem:[%s3 + $0x38] sm:$0xff] %v3170
  %3192 = vst [vmem:[%s3 + $0x40] sm:$0xff] %v3171
  %3193 = vst [vmem:[%s3 + $0x48] sm:$0xff] %v3172
  %3194 = vst [vmem:[%s3 + $0x50] sm:$0xff] %v3173
  %3195 = vst [vmem:[%s3 + $0x58] sm:$0xff] %v3174
  %3196 = vst [vmem:[%s3 + $0x60] sm:$0xff] %v3175
  %3197 = vst [vmem:[%s3 + $0x68] sm:$0xff] %v3176
  %3198 = vst [vmem:[%s3 + $0x70] sm:$0xff] %v3177
  %3199 = vst [vmem:[%s3 + $0x78] sm:$0xff] %v3178
  %3200 = vst [vmem:[%s3 + $0x80] sm:$0xff] %v3179
  %3201 = vst [vmem:[%s3 + $0x88] sm:$0xff] %v3180
  %3202 = vst [vmem:[%s3 + $0x90] sm:$0x1] %v3181
  %3203 = vst [vmem:[%s3 + $0x98] sm:$0x1] %v3182
  %3204 = vst [vmem:[%s3 + $0xa0] sm:$0x1] %v3183
  // Predicated region
  $region14: #{conv2d_batchnorm.1} parent=0 // pred_check
    _
  $region15: #{conv2d_batchnorm.1} parent=0 // pred_check_branch
    %3206 = sbr.rel (0) target = $region17
  $region16: #{conv2d_batchnorm.1} parent=0 // pred_region
    _
  $region17: #{conv2d_batchnorm.1} parent=0 // pred_fallthru
    _
  // Predicated region
  $region18: #{conv2d_batchnorm.1} parent=0 // pred_check
    _
  $region19: #{conv2d_batchnorm.1} parent=0 // pred_check_branch
    %3208 = sbr.rel (0) target = $region21
  $region20: #{conv2d_batchnorm.1} parent=0 // pred_region
    _
  $region21: #{conv2d_batchnorm.1} parent=0 // pred_fallthru
    _

</llo_original>
